<compile_context>
chip_gen: v6e
topology: v6e:2x2x1
jax: 0.10.0
libtpu: 0.0.40
codegen_flags: <defaults>
</compile_context>

<pallas_src>
import jax
import jax.numpy as jnp
from jax import lax
from jax.experimental import pallas as pl
from jax.experimental.pallas import tpu as pltpu

HIDDEN_SIZE = 64
INPUT_SIZE = 2
NUM_LAYERS = 1          # single-layer LSTM (module default)
OUTPUT_SIZE = 3
LANE = 128              # TPU vreg lane width; pad H and the output dim to this


def lstm_model_kernel(x_ref, wih_ref, b_ref, whh_ref, wfc_ref, bfc_ref, out_ref):
    """x_ref:   (S, B, I)  f32   time-major input
       wih_ref: (I, 4*Hp)  f32   W_ih^T, gate blocks [i,f,o,g] zero-padded H->Hp
       b_ref:   (1, 4*Hp)  f32   b_ih + b_hh, same ordering/padding
       whh_ref: (Hp, 4*Hp) bf16  W_hh^T, padded rows/cols are zero
       wfc_ref: (H, Op)    f32   W_fc^T, output dim zero-padded O->Op
       bfc_ref: (1, Op)    f32   b_fc, padded lanes = -1e30 (softmax mask)
       out_ref: (B, Op)    f32   lane-dense softmax output (wrapper slices [:, :O])"""
    S, B, I = x_ref.shape
    Hp = whh_ref.shape[0]
    H = wfc_ref.shape[0]

    def step(t, carry):
        h_bf, c = carry                                   # h: (B,Hp) bf16, c: (B,Hp) f32
        x_t = x_ref[t]                                    # (B, I) f32
        # input projection: I==2 broadcasted mul-adds (VALU) + bias, fused in-kernel
        gates = b_ref[...]                                # (1, 4Hp) -> broadcasts to (B, 4Hp)
        for k in range(I):
            gates = gates + x_t[:, k:k + 1] * wih_ref[k:k + 1, :]
        # one MXU push per serialized step: bf16 operands, f32 accumulation.
        # whh is re-read from VMEM each step (not held live across the unrolled loop).
        # TODO(synk): stage the RHS once via pltpu.matmul_push_rhs/matmul_acc_lhs when
        # driving the MXU explicitly becomes worthwhile (long S, tiny B).
        gates = gates + jnp.dot(h_bf, whh_ref[...],
                                preferred_element_type=jnp.float32)   # (B, 4Hp)
        # [i|f|o] is one contiguous 3*Hp slab -> single sigmoid; g is the last Hp slab
        sig = jax.nn.sigmoid(gates[:, :3 * Hp])
        g_g = jnp.tanh(gates[:, 3 * Hp:])
        i_g = sig[:, 0 * Hp:1 * Hp]
        f_g = sig[:, 1 * Hp:2 * Hp]
        o_g = sig[:, 2 * Hp:3 * Hp]
        c_new = f_g * c + i_g * g_g
        h_new = o_g * jnp.tanh(c_new)
        # carry h in bf16 so the pack sits here, off the next matmul's critical edge
        return (h_new.astype(jnp.bfloat16), c_new)

    h0 = jnp.zeros((B, Hp), jnp.bfloat16)
    c0 = jnp.zeros((B, Hp), jnp.float32)
    # S is static -> fully unrolled recurrence (LLO gets cross-step visibility)
    h_last, _ = lax.fori_loop(0, S, step, (h0, c0), unroll=True)

    # final Linear + softmax (padded logits carry a -1e30 f32 bias -> exp() == 0)
    logits = jnp.dot(h_last[:, :H].astype(jnp.float32), wfc_ref[...],
                     preferred_element_type=jnp.float32) + bfc_ref[...]   # (B, Op)
    m = jnp.max(logits, axis=-1, keepdims=True)
    e = jnp.exp(logits - m)
    inv = pl.reciprocal(jnp.sum(e, axis=-1, keepdims=True), approx=True)  # EUP slot
    out_ref[...] = e * inv


def prepare_params(params):
    """One-time preparation of padded / reordered / transposed / bf16 weights.
    Call once after init; pass the result to every forward call."""
    H, I, O = HIDDEN_SIZE, INPUT_SIZE, OUTPUT_SIZE
    Hp, Op = LANE, LANE
    f32 = jnp.float32

    def reorder_pad_rows(w):
        """(4H, ...) PyTorch gate order [i,f,g,o] -> [i,f,o,g], each block padded H->Hp."""
        i_b, f_b, g_b, o_b = (w[k * H:(k + 1) * H] for k in range(4))
        blocks = []
        for blk in (i_b, f_b, o_b, g_b):
            widths = [(0, Hp - H)] + [(0, 0)] * (blk.ndim - 1)
            blocks.append(jnp.pad(blk, widths))
        return jnp.concatenate(blocks, axis=0)

    w_ih = params["w_ih"].astype(f32)                         # (4H, I)
    w_hh = params["w_hh"].astype(f32)                         # (4H, H)
    b = (params["b_ih"] + params["b_hh"]).astype(f32)         # (4H,)

    wih_p = reorder_pad_rows(w_ih)                            # (4Hp, I)
    whh_p = reorder_pad_rows(w_hh)                            # (4Hp, H)
    whh_p = jnp.pad(whh_p, ((0, 0), (0, Hp - H)))             # (4Hp, Hp), zero cols
    b_p = reorder_pad_rows(b[:, None])[:, 0]                  # (4Hp,)

    wfc_p = jnp.pad(params["w_fc"].astype(f32).T, ((0, 0), (0, Op - O)))   # (H, Op)
    bfc_p = jnp.full((1, Op), jnp.float32(-1e30), f32).at[0, :O].set(
        params["b_fc"].astype(f32))

    return {
        "wih_t": wih_p.T,                                     # (I, 4Hp)  f32
        "b":     b_p[None, :],                                # (1, 4Hp)  f32
        "whh_t": whh_p.T.astype(jnp.bfloat16),                # (Hp, 4Hp) bf16 MXU operand
        "wfc":   wfc_p,                                       # (H, Op)   f32
        "bfc":   bfc_p,                                       # (1, Op)   f32
    }


@jax.jit
def lstm_model_2d_forward(x, prep):
    """x: (B, S, I) float32, batch-first like PyTorch. Returns (B, O) softmax probs."""
    B = x.shape[0]
    Op = prep["bfc"].shape[1]
    x_tm = jnp.transpose(x, (1, 0, 2)).astype(jnp.float32)    # (S, B, I) time-major

    # TODO(synk): scaling path — for large S/B use grid=(ceil(S/Ts),) with the time axis
    # "arbitrary", h/c in VMEM scratch_shapes persisting across grid steps (init under
    # pl.when(program_id==0)), x delivered via a time-chunk BlockSpec (auto double-
    # buffered), an extra "parallel" batch axis for v7x's two TensorCores, and an
    # explicit pltpu.CompilerParams(vmem_limit_bytes=...) budgeted for v7x's 64 MiB /
    # v5e's 16 MiB default scoped VMEM. At B=2, S=8 everything fits and a grid-less
    # call is the right shape.
    out_p = pl.pallas_call(
        lstm_model_kernel,
        out_shape=jax.ShapeDtypeStruct((B, Op), jnp.float32),
        in_specs=[pl.BlockSpec(memory_space=pltpu.MemorySpace.VMEM)] * 6,
        out_specs=pl.BlockSpec(memory_space=pltpu.MemorySpace.VMEM),
    )(x_tm, prep["wih_t"], prep["b"], prep["whh_t"], prep["wfc"], prep["bfc"])

    return out_p[:, :OUTPUT_SIZE]


def init_params(key, input_size, hidden_size, output_size):
    """Deterministic init matching PyTorch parameter shapes (U(-k, k), k=1/sqrt(H))."""
    k = 1.0 / jnp.sqrt(jnp.float32(hidden_size))
    ks = jax.random.split(key, 6)
    u = lambda kk, shape: jax.random.uniform(kk, shape, jnp.float32, -k, k)
    return {
        "w_ih": u(ks[0], (4 * hidden_size, input_size)),
        "w_hh": u(ks[1], (4 * hidden_size, hidden_size)),
        "b_ih": u(ks[2], (4 * hidden_size,)),
        "b_hh": u(ks[3], (4 * hidden_size,)),
        "w_fc": u(ks[4], (output_size, hidden_size)),
        "b_fc": u(ks[5], (output_size,)),
    }


def reference_forward(x, params):
    """Pure-JAX f32 reference of the PyTorch forward (sanity check)."""
    B = x.shape[0]
    H = HIDDEN_SIZE

    def cell(carry, x_t):
        h, c = carry
        gates = (x_t @ params["w_ih"].T + h @ params["w_hh"].T
                 + params["b_ih"] + params["b_hh"])
        i_g = jax.nn.sigmoid(gates[:, 0 * H:1 * H])
        f_g = jax.nn.sigmoid(gates[:, 1 * H:2 * H])
        g_g = jnp.tanh(gates[:, 2 * H:3 * H])
        o_g = jax.nn.sigmoid(gates[:, 3 * H:4 * H])
        c_new = f_g * c + i_g * g_g
        h_new = o_g * jnp.tanh(c_new)
        return (h_new, c_new), None

    h0 = jnp.zeros((B, H), jnp.float32)
    c0 = jnp.zeros((B, H), jnp.float32)
    (h_last, _), _ = lax.scan(cell, (h0, c0), jnp.transpose(x, (1, 0, 2)))
    logits = h_last @ params["w_fc"].T + params["b_fc"]
    return jax.nn.softmax(logits, axis=1)


if __name__ == "__main__":
    batch, seq = 2, 8
    key = jax.random.PRNGKey(0)
    k_x, k_p = jax.random.split(key)

    x = jax.random.normal(k_x, (batch, seq, INPUT_SIZE), jnp.float32)
    params = init_params(k_p, INPUT_SIZE, HIDDEN_SIZE, OUTPUT_SIZE)
    prep = jax.tree_util.tree_map(jax.block_until_ready, prepare_params(params))

    out = jax.block_until_ready(lstm_model_2d_forward(x, prep))
    ref = jax.block_until_ready(reference_forward(x, params))

    assert out.shape == (batch, OUTPUT_SIZE)
    assert bool(jnp.allclose(out, ref, rtol=1e-2, atol=1e-2)), "mismatch vs reference"
    print("KERNEL_OK")
</pallas_src>

<mosaic_0001>
module attributes {stable_mosaic.version = 11 : i64} {
  func.func @lstm_model_kernel(%arg0: memref<8x2x2xf32, #tpu.memory_space<vmem>>, %arg1: memref<2x512xf32, #tpu.memory_space<vmem>>, %arg2: memref<1x512xf32, #tpu.memory_space<vmem>>, %arg3: memref<128x512xbf16, #tpu.memory_space<vmem>>, %arg4: memref<64x128xf32, #tpu.memory_space<vmem>>, %arg5: memref<1x128xf32, #tpu.memory_space<vmem>>, %arg6: memref<2x128xf32, #tpu.memory_space<vmem>>) attributes {dimension_semantics = [], scalar_prefetch = 0 : i64, scratch_operands = 0 : i64, tpu.core_type = #tpu.core_type<tc>} {
    %cst = arith.constant 0.000000e+00 : bf16
    %0 = vector.broadcast %cst : bf16 to vector<2x128xbf16>
    %cst_0 = arith.constant 0.000000e+00 : f32
    %1 = vector.broadcast %cst_0 : f32 to vector<2x128xf32>
    %c0_i32 = arith.constant 0 : i32
    %2 = arith.index_cast %c0_i32 : i32 to index
    %c0 = arith.constant 0 : index
    %c0_1 = arith.constant 0 : index
    %3 = vector.load %arg0[%2, %c0, %c0_1] : memref<8x2x2xf32, #tpu.memory_space<vmem>>, vector<1x2x2xf32>
    %4 = vector.shape_cast %3 : vector<1x2x2xf32> to vector<2x2xf32>
    %c0_2 = arith.constant 0 : index
    %c0_3 = arith.constant 0 : index
    %5 = vector.load %arg2[%c0_2, %c0_3] : memref<1x512xf32, #tpu.memory_space<vmem>>, vector<1x512xf32>
    %6 = vector.extract_strided_slice %4 {offsets = [0, 0], sizes = [2, 1], strides = [1, 1]} : vector<2x2xf32> to vector<2x1xf32>
    %c0_4 = arith.constant 0 : index
    %c0_5 = arith.constant 0 : index
    %7 = vector.load %arg1[%c0_4, %c0_5] : memref<2x512xf32, #tpu.memory_space<vmem>>, vector<1x512xf32>
    %8 = vector.broadcast %6 : vector<2x1xf32> to vector<2x512xf32>
    %9 = vector.broadcast %7 : vector<1x512xf32> to vector<2x512xf32>
    %10 = arith.mulf %8, %9 : vector<2x512xf32>
    %11 = vector.broadcast %5 : vector<1x512xf32> to vector<2x512xf32>
    %12 = arith.addf %11, %10 : vector<2x512xf32>
    %13 = vector.extract_strided_slice %4 {offsets = [0, 1], sizes = [2, 1], strides = [1, 1]} : vector<2x2xf32> to vector<2x1xf32>
    %c1 = arith.constant 1 : index
    %c0_6 = arith.constant 0 : index
    %14 = vector.load %arg1[%c1, %c0_6] : memref<2x512xf32, #tpu.memory_space<vmem>>, vector<1x512xf32>
    %15 = vector.broadcast %13 : vector<2x1xf32> to vector<2x512xf32>
    %16 = vector.broadcast %14 : vector<1x512xf32> to vector<2x512xf32>
    %17 = arith.mulf %15, %16 : vector<2x512xf32>
    %18 = arith.addf %12, %17 : vector<2x512xf32>
    %c0_7 = arith.constant 0 : index
    %c0_8 = arith.constant 0 : index
    %19 = vector.load %arg3[%c0_7, %c0_8] : memref<128x512xbf16, #tpu.memory_space<vmem>>, vector<128x512xbf16>
    %cst_9 = arith.constant dense<0.000000e+00> : vector<2x512xf32>
    %20 = tpu.matmul %0, %19, %cst_9 {dimension_numbers = #tpu.dot_dimension_numbers<[1], [0], [0], [1], [0, 0, 1, 1], [], []>} : vector<2x128xbf16>, vector<128x512xbf16>, vector<2x512xf32> -> vector<2x512xf32>
    %21 = arith.addf %18, %20 : vector<2x512xf32>
    %22 = vector.extract_strided_slice %21 {offsets = [0, 0], sizes = [2, 384], strides = [1, 1]} : vector<2x512xf32> to vector<2x384xf32>
    %23 = arith.negf %22 : vector<2x384xf32>
    %24 = math.exp %23 : vector<2x384xf32>
    %cst_10 = arith.constant 1.000000e+00 : f32
    %25 = vector.broadcast %cst_10 : f32 to vector<2x384xf32>
    %26 = arith.addf %25, %24 : vector<2x384xf32>
    %27 = arith.divf %25, %26 : vector<2x384xf32>
    %28 = vector.extract_strided_slice %21 {offsets = [0, 384], sizes = [2, 128], strides = [1, 1]} : vector<2x512xf32> to vector<2x128xf32>
    %29 = math.tanh %28 : vector<2x128xf32>
    %30 = vector.extract_strided_slice %27 {offsets = [0, 0], sizes = [2, 128], strides = [1, 1]} : vector<2x384xf32> to vector<2x128xf32>
    %31 = vector.extract_strided_slice %27 {offsets = [0, 128], sizes = [2, 128], strides = [1, 1]} : vector<2x384xf32> to vector<2x128xf32>
    %32 = vector.extract_strided_slice %27 {offsets = [0, 256], sizes = [2, 128], strides = [1, 1]} : vector<2x384xf32> to vector<2x128xf32>
    %33 = arith.mulf %31, %1 : vector<2x128xf32>
    %34 = arith.mulf %30, %29 : vector<2x128xf32>
    %35 = arith.addf %33, %34 : vector<2x128xf32>
    %36 = math.tanh %35 : vector<2x128xf32>
    %37 = arith.mulf %32, %36 : vector<2x128xf32>
    %38 = arith.truncf %37 : vector<2x128xf32> to vector<2x128xbf16>
    %c1_i32 = arith.constant 1 : i32
    %39 = arith.index_cast %c1_i32 : i32 to index
    %c0_11 = arith.constant 0 : index
    %c0_12 = arith.constant 0 : index
    %40 = vector.load %arg0[%39, %c0_11, %c0_12] : memref<8x2x2xf32, #tpu.memory_space<vmem>>, vector<1x2x2xf32>
    %41 = vector.shape_cast %40 : vector<1x2x2xf32> to vector<2x2xf32>
    %c0_13 = arith.constant 0 : index
    %c0_14 = arith.constant 0 : index
    %42 = vector.load %arg2[%c0_13, %c0_14] : memref<1x512xf32, #tpu.memory_space<vmem>>, vector<1x512xf32>
    %43 = vector.extract_strided_slice %41 {offsets = [0, 0], sizes = [2, 1], strides = [1, 1]} : vector<2x2xf32> to vector<2x1xf32>
    %c0_15 = arith.constant 0 : index
    %c0_16 = arith.constant 0 : index
    %44 = vector.load %arg1[%c0_15, %c0_16] : memref<2x512xf32, #tpu.memory_space<vmem>>, vector<1x512xf32>
    %45 = vector.broadcast %43 : vector<2x1xf32> to vector<2x512xf32>
    %46 = vector.broadcast %44 : vector<1x512xf32> to vector<2x512xf32>
    %47 = arith.mulf %45, %46 : vector<2x512xf32>
    %48 = vector.broadcast %42 : vector<1x512xf32> to vector<2x512xf32>
    %49 = arith.addf %48, %47 : vector<2x512xf32>
    %50 = vector.extract_strided_slice %41 {offsets = [0, 1], sizes = [2, 1], strides = [1, 1]} : vector<2x2xf32> to vector<2x1xf32>
    %c1_17 = arith.constant 1 : index
    %c0_18 = arith.constant 0 : index
    %51 = vector.load %arg1[%c1_17, %c0_18] : memref<2x512xf32, #tpu.memory_space<vmem>>, vector<1x512xf32>
    %52 = vector.broadcast %50 : vector<2x1xf32> to vector<2x512xf32>
    %53 = vector.broadcast %51 : vector<1x512xf32> to vector<2x512xf32>
    %54 = arith.mulf %52, %53 : vector<2x512xf32>
    %55 = arith.addf %49, %54 : vector<2x512xf32>
    %c0_19 = arith.constant 0 : index
    %c0_20 = arith.constant 0 : index
    %56 = vector.load %arg3[%c0_19, %c0_20] : memref<128x512xbf16, #tpu.memory_space<vmem>>, vector<128x512xbf16>
    %cst_21 = arith.constant dense<0.000000e+00> : vector<2x512xf32>
    %57 = tpu.matmul %38, %56, %cst_21 {dimension_numbers = #tpu.dot_dimension_numbers<[1], [0], [0], [1], [0, 0, 1, 1], [], []>} : vector<2x128xbf16>, vector<128x512xbf16>, vector<2x512xf32> -> vector<2x512xf32>
    %58 = arith.addf %55, %57 : vector<2x512xf32>
    %59 = vector.extract_strided_slice %58 {offsets = [0, 0], sizes = [2, 384], strides = [1, 1]} : vector<2x512xf32> to vector<2x384xf32>
    %60 = arith.negf %59 : vector<2x384xf32>
    %61 = math.exp %60 : vector<2x384xf32>
    %cst_22 = arith.constant 1.000000e+00 : f32
    %62 = vector.broadcast %cst_22 : f32 to vector<2x384xf32>
    %63 = arith.addf %62, %61 : vector<2x384xf32>
    %64 = arith.divf %62, %63 : vector<2x384xf32>
    %65 = vector.extract_strided_slice %58 {offsets = [0, 384], sizes = [2, 128], strides = [1, 1]} : vector<2x512xf32> to vector<2x128xf32>
    %66 = math.tanh %65 : vector<2x128xf32>
    %67 = vector.extract_strided_slice %64 {offsets = [0, 0], sizes = [2, 128], strides = [1, 1]} : vector<2x384xf32> to vector<2x128xf32>
    %68 = vector.extract_strided_slice %64 {offsets = [0, 128], sizes = [2, 128], strides = [1, 1]} : vector<2x384xf32> to vector<2x128xf32>
    %69 = vector.extract_strided_slice %64 {offsets = [0, 256], sizes = [2, 128], strides = [1, 1]} : vector<2x384xf32> to vector<2x128xf32>
    %70 = arith.mulf %68, %35 : vector<2x128xf32>
    %71 = arith.mulf %67, %66 : vector<2x128xf32>
    %72 = arith.addf %70, %71 : vector<2x128xf32>
    %73 = math.tanh %72 : vector<2x128xf32>
    %74 = arith.mulf %69, %73 : vector<2x128xf32>
    %75 = arith.truncf %74 : vector<2x128xf32> to vector<2x128xbf16>
    %c2_i32 = arith.constant 2 : i32
    %76 = arith.index_cast %c2_i32 : i32 to index
    %c0_23 = arith.constant 0 : index
    %c0_24 = arith.constant 0 : index
    %77 = vector.load %arg0[%76, %c0_23, %c0_24] : memref<8x2x2xf32, #tpu.memory_space<vmem>>, vector<1x2x2xf32>
    %78 = vector.shape_cast %77 : vector<1x2x2xf32> to vector<2x2xf32>
    %c0_25 = arith.constant 0 : index
    %c0_26 = arith.constant 0 : index
    %79 = vector.load %arg2[%c0_25, %c0_26] : memref<1x512xf32, #tpu.memory_space<vmem>>, vector<1x512xf32>
    %80 = vector.extract_strided_slice %78 {offsets = [0, 0], sizes = [2, 1], strides = [1, 1]} : vector<2x2xf32> to vector<2x1xf32>
    %c0_27 = arith.constant 0 : index
    %c0_28 = arith.constant 0 : index
    %81 = vector.load %arg1[%c0_27, %c0_28] : memref<2x512xf32, #tpu.memory_space<vmem>>, vector<1x512xf32>
    %82 = vector.broadcast %80 : vector<2x1xf32> to vector<2x512xf32>
    %83 = vector.broadcast %81 : vector<1x512xf32> to vector<2x512xf32>
    %84 = arith.mulf %82, %83 : vector<2x512xf32>
    %85 = vector.broadcast %79 : vector<1x512xf32> to vector<2x512xf32>
    %86 = arith.addf %85, %84 : vector<2x512xf32>
    %87 = vector.extract_strided_slice %78 {offsets = [0, 1], sizes = [2, 1], strides = [1, 1]} : vector<2x2xf32> to vector<2x1xf32>
    %c1_29 = arith.constant 1 : index
    %c0_30 = arith.constant 0 : index
    %88 = vector.load %arg1[%c1_29, %c0_30] : memref<2x512xf32, #tpu.memory_space<vmem>>, vector<1x512xf32>
    %89 = vector.broadcast %87 : vector<2x1xf32> to vector<2x512xf32>
    %90 = vector.broadcast %88 : vector<1x512xf32> to vector<2x512xf32>
    %91 = arith.mulf %89, %90 : vector<2x512xf32>
    %92 = arith.addf %86, %91 : vector<2x512xf32>
    %c0_31 = arith.constant 0 : index
    %c0_32 = arith.constant 0 : index
    %93 = vector.load %arg3[%c0_31, %c0_32] : memref<128x512xbf16, #tpu.memory_space<vmem>>, vector<128x512xbf16>
    %cst_33 = arith.constant dense<0.000000e+00> : vector<2x512xf32>
    %94 = tpu.matmul %75, %93, %cst_33 {dimension_numbers = #tpu.dot_dimension_numbers<[1], [0], [0], [1], [0, 0, 1, 1], [], []>} : vector<2x128xbf16>, vector<128x512xbf16>, vector<2x512xf32> -> vector<2x512xf32>
    %95 = arith.addf %92, %94 : vector<2x512xf32>
    %96 = vector.extract_strided_slice %95 {offsets = [0, 0], sizes = [2, 384], strides = [1, 1]} : vector<2x512xf32> to vector<2x384xf32>
    %97 = arith.negf %96 : vector<2x384xf32>
    %98 = math.exp %97 : vector<2x384xf32>
    %cst_34 = arith.constant 1.000000e+00 : f32
    %99 = vector.broadcast %cst_34 : f32 to vector<2x384xf32>
    %100 = arith.addf %99, %98 : vector<2x384xf32>
    %101 = arith.divf %99, %100 : vector<2x384xf32>
    %102 = vector.extract_strided_slice %95 {offsets = [0, 384], sizes = [2, 128], strides = [1, 1]} : vector<2x512xf32> to vector<2x128xf32>
    %103 = math.tanh %102 : vector<2x128xf32>
    %104 = vector.extract_strided_slice %101 {offsets = [0, 0], sizes = [2, 128], strides = [1, 1]} : vector<2x384xf32> to vector<2x128xf32>
    %105 = vector.extract_strided_slice %101 {offsets = [0, 128], sizes = [2, 128], strides = [1, 1]} : vector<2x384xf32> to vector<2x128xf32>
    %106 = vector.extract_strided_slice %101 {offsets = [0, 256], sizes = [2, 128], strides = [1, 1]} : vector<2x384xf32> to vector<2x128xf32>
    %107 = arith.mulf %105, %72 : vector<2x128xf32>
    %108 = arith.mulf %104, %103 : vector<2x128xf32>
    %109 = arith.addf %107, %108 : vector<2x128xf32>
    %110 = math.tanh %109 : vector<2x128xf32>
    %111 = arith.mulf %106, %110 : vector<2x128xf32>
    %112 = arith.truncf %111 : vector<2x128xf32> to vector<2x128xbf16>
    %c3_i32 = arith.constant 3 : i32
    %113 = arith.index_cast %c3_i32 : i32 to index
    %c0_35 = arith.constant 0 : index
    %c0_36 = arith.constant 0 : index
    %114 = vector.load %arg0[%113, %c0_35, %c0_36] : memref<8x2x2xf32, #tpu.memory_space<vmem>>, vector<1x2x2xf32>
    %115 = vector.shape_cast %114 : vector<1x2x2xf32> to vector<2x2xf32>
    %c0_37 = arith.constant 0 : index
    %c0_38 = arith.constant 0 : index
    %116 = vector.load %arg2[%c0_37, %c0_38] : memref<1x512xf32, #tpu.memory_space<vmem>>, vector<1x512xf32>
    %117 = vector.extract_strided_slice %115 {offsets = [0, 0], sizes = [2, 1], strides = [1, 1]} : vector<2x2xf32> to vector<2x1xf32>
    %c0_39 = arith.constant 0 : index
    %c0_40 = arith.constant 0 : index
    %118 = vector.load %arg1[%c0_39, %c0_40] : memref<2x512xf32, #tpu.memory_space<vmem>>, vector<1x512xf32>
    %119 = vector.broadcast %117 : vector<2x1xf32> to vector<2x512xf32>
    %120 = vector.broadcast %118 : vector<1x512xf32> to vector<2x512xf32>
    %121 = arith.mulf %119, %120 : vector<2x512xf32>
    %122 = vector.broadcast %116 : vector<1x512xf32> to vector<2x512xf32>
    %123 = arith.addf %122, %121 : vector<2x512xf32>
    %124 = vector.extract_strided_slice %115 {offsets = [0, 1], sizes = [2, 1], strides = [1, 1]} : vector<2x2xf32> to vector<2x1xf32>
    %c1_41 = arith.constant 1 : index
    %c0_42 = arith.constant 0 : index
    %125 = vector.load %arg1[%c1_41, %c0_42] : memref<2x512xf32, #tpu.memory_space<vmem>>, vector<1x512xf32>
    %126 = vector.broadcast %124 : vector<2x1xf32> to vector<2x512xf32>
    %127 = vector.broadcast %125 : vector<1x512xf32> to vector<2x512xf32>
    %128 = arith.mulf %126, %127 : vector<2x512xf32>
    %129 = arith.addf %123, %128 : vector<2x512xf32>
    %c0_43 = arith.constant 0 : index
    %c0_44 = arith.constant 0 : index
    %130 = vector.load %arg3[%c0_43, %c0_44] : memref<128x512xbf16, #tpu.memory_space<vmem>>, vector<128x512xbf16>
    %cst_45 = arith.constant dense<0.000000e+00> : vector<2x512xf32>
    %131 = tpu.matmul %112, %130, %cst_45 {dimension_numbers = #tpu.dot_dimension_numbers<[1], [0], [0], [1], [0, 0, 1, 1], [], []>} : vector<2x128xbf16>, vector<128x512xbf16>, vector<2x512xf32> -> vector<2x512xf32>
    %132 = arith.addf %129, %131 : vector<2x512xf32>
    %133 = vector.extract_strided_slice %132 {offsets = [0, 0], sizes = [2, 384], strides = [1, 1]} : vector<2x512xf32> to vector<2x384xf32>
    %134 = arith.negf %133 : vector<2x384xf32>
    %135 = math.exp %134 : vector<2x384xf32>
    %cst_46 = arith.constant 1.000000e+00 : f32
    %136 = vector.broadcast %cst_46 : f32 to vector<2x384xf32>
    %137 = arith.addf %136, %135 : vector<2x384xf32>
    %138 = arith.divf %136, %137 : vector<2x384xf32>
    %139 = vector.extract_strided_slice %132 {offsets = [0, 384], sizes = [2, 128], strides = [1, 1]} : vector<2x512xf32> to vector<2x128xf32>
    %140 = math.tanh %139 : vector<2x128xf32>
    %141 = vector.extract_strided_slice %138 {offsets = [0, 0], sizes = [2, 128], strides = [1, 1]} : vector<2x384xf32> to vector<2x128xf32>
    %142 = vector.extract_strided_slice %138 {offsets = [0, 128], sizes = [2, 128], strides = [1, 1]} : vector<2x384xf32> to vector<2x128xf32>
    %143 = vector.extract_strided_slice %138 {offsets = [0, 256], sizes = [2, 128], strides = [1, 1]} : vector<2x384xf32> to vector<2x128xf32>
    %144 = arith.mulf %142, %109 : vector<2x128xf32>
    %145 = arith.mulf %141, %140 : vector<2x128xf32>
    %146 = arith.addf %144, %145 : vector<2x128xf32>
    %147 = math.tanh %146 : vector<2x128xf32>
    %148 = arith.mulf %143, %147 : vector<2x128xf32>
    %149 = arith.truncf %148 : vector<2x128xf32> to vector<2x128xbf16>
    %c4_i32 = arith.constant 4 : i32
    %150 = arith.index_cast %c4_i32 : i32 to index
    %c0_47 = arith.constant 0 : index
    %c0_48 = arith.constant 0 : index
    %151 = vector.load %arg0[%150, %c0_47, %c0_48] : memref<8x2x2xf32, #tpu.memory_space<vmem>>, vector<1x2x2xf32>
    %152 = vector.shape_cast %151 : vector<1x2x2xf32> to vector<2x2xf32>
    %c0_49 = arith.constant 0 : index
    %c0_50 = arith.constant 0 : index
    %153 = vector.load %arg2[%c0_49, %c0_50] : memref<1x512xf32, #tpu.memory_space<vmem>>, vector<1x512xf32>
    %154 = vector.extract_strided_slice %152 {offsets = [0, 0], sizes = [2, 1], strides = [1, 1]} : vector<2x2xf32> to vector<2x1xf32>
    %c0_51 = arith.constant 0 : index
    %c0_52 = arith.constant 0 : index
    %155 = vector.load %arg1[%c0_51, %c0_52] : memref<2x512xf32, #tpu.memory_space<vmem>>, vector<1x512xf32>
    %156 = vector.broadcast %154 : vector<2x1xf32> to vector<2x512xf32>
    %157 = vector.broadcast %155 : vector<1x512xf32> to vector<2x512xf32>
    %158 = arith.mulf %156, %157 : vector<2x512xf32>
    %159 = vector.broadcast %153 : vector<1x512xf32> to vector<2x512xf32>
    %160 = arith.addf %159, %158 : vector<2x512xf32>
    %161 = vector.extract_strided_slice %152 {offsets = [0, 1], sizes = [2, 1], strides = [1, 1]} : vector<2x2xf32> to vector<2x1xf32>
    %c1_53 = arith.constant 1 : index
    %c0_54 = arith.constant 0 : index
    %162 = vector.load %arg1[%c1_53, %c0_54] : memref<2x512xf32, #tpu.memory_space<vmem>>, vector<1x512xf32>
    %163 = vector.broadcast %161 : vector<2x1xf32> to vector<2x512xf32>
    %164 = vector.broadcast %162 : vector<1x512xf32> to vector<2x512xf32>
    %165 = arith.mulf %163, %164 : vector<2x512xf32>
    %166 = arith.addf %160, %165 : vector<2x512xf32>
    %c0_55 = arith.constant 0 : index
    %c0_56 = arith.constant 0 : index
    %167 = vector.load %arg3[%c0_55, %c0_56] : memref<128x512xbf16, #tpu.memory_space<vmem>>, vector<128x512xbf16>
    %cst_57 = arith.constant dense<0.000000e+00> : vector<2x512xf32>
    %168 = tpu.matmul %149, %167, %cst_57 {dimension_numbers = #tpu.dot_dimension_numbers<[1], [0], [0], [1], [0, 0, 1, 1], [], []>} : vector<2x128xbf16>, vector<128x512xbf16>, vector<2x512xf32> -> vector<2x512xf32>
    %169 = arith.addf %166, %168 : vector<2x512xf32>
    %170 = vector.extract_strided_slice %169 {offsets = [0, 0], sizes = [2, 384], strides = [1, 1]} : vector<2x512xf32> to vector<2x384xf32>
    %171 = arith.negf %170 : vector<2x384xf32>
    %172 = math.exp %171 : vector<2x384xf32>
    %cst_58 = arith.constant 1.000000e+00 : f32
    %173 = vector.broadcast %cst_58 : f32 to vector<2x384xf32>
    %174 = arith.addf %173, %172 : vector<2x384xf32>
    %175 = arith.divf %173, %174 : vector<2x384xf32>
    %176 = vector.extract_strided_slice %169 {offsets = [0, 384], sizes = [2, 128], strides = [1, 1]} : vector<2x512xf32> to vector<2x128xf32>
    %177 = math.tanh %176 : vector<2x128xf32>
    %178 = vector.extract_strided_slice %175 {offsets = [0, 0], sizes = [2, 128], strides = [1, 1]} : vector<2x384xf32> to vector<2x128xf32>
    %179 = vector.extract_strided_slice %175 {offsets = [0, 128], sizes = [2, 128], strides = [1, 1]} : vector<2x384xf32> to vector<2x128xf32>
    %180 = vector.extract_strided_slice %175 {offsets = [0, 256], sizes = [2, 128], strides = [1, 1]} : vector<2x384xf32> to vector<2x128xf32>
    %181 = arith.mulf %179, %146 : vector<2x128xf32>
    %182 = arith.mulf %178, %177 : vector<2x128xf32>
    %183 = arith.addf %181, %182 : vector<2x128xf32>
    %184 = math.tanh %183 : vector<2x128xf32>
    %185 = arith.mulf %180, %184 : vector<2x128xf32>
    %186 = arith.truncf %185 : vector<2x128xf32> to vector<2x128xbf16>
    %c5_i32 = arith.constant 5 : i32
    %187 = arith.index_cast %c5_i32 : i32 to index
    %c0_59 = arith.constant 0 : index
    %c0_60 = arith.constant 0 : index
    %188 = vector.load %arg0[%187, %c0_59, %c0_60] : memref<8x2x2xf32, #tpu.memory_space<vmem>>, vector<1x2x2xf32>
    %189 = vector.shape_cast %188 : vector<1x2x2xf32> to vector<2x2xf32>
    %c0_61 = arith.constant 0 : index
    %c0_62 = arith.constant 0 : index
    %190 = vector.load %arg2[%c0_61, %c0_62] : memref<1x512xf32, #tpu.memory_space<vmem>>, vector<1x512xf32>
    %191 = vector.extract_strided_slice %189 {offsets = [0, 0], sizes = [2, 1], strides = [1, 1]} : vector<2x2xf32> to vector<2x1xf32>
    %c0_63 = arith.constant 0 : index
    %c0_64 = arith.constant 0 : index
    %192 = vector.load %arg1[%c0_63, %c0_64] : memref<2x512xf32, #tpu.memory_space<vmem>>, vector<1x512xf32>
    %193 = vector.broadcast %191 : vector<2x1xf32> to vector<2x512xf32>
    %194 = vector.broadcast %192 : vector<1x512xf32> to vector<2x512xf32>
    %195 = arith.mulf %193, %194 : vector<2x512xf32>
    %196 = vector.broadcast %190 : vector<1x512xf32> to vector<2x512xf32>
    %197 = arith.addf %196, %195 : vector<2x512xf32>
    %198 = vector.extract_strided_slice %189 {offsets = [0, 1], sizes = [2, 1], strides = [1, 1]} : vector<2x2xf32> to vector<2x1xf32>
    %c1_65 = arith.constant 1 : index
    %c0_66 = arith.constant 0 : index
    %199 = vector.load %arg1[%c1_65, %c0_66] : memref<2x512xf32, #tpu.memory_space<vmem>>, vector<1x512xf32>
    %200 = vector.broadcast %198 : vector<2x1xf32> to vector<2x512xf32>
    %201 = vector.broadcast %199 : vector<1x512xf32> to vector<2x512xf32>
    %202 = arith.mulf %200, %201 : vector<2x512xf32>
    %203 = arith.addf %197, %202 : vector<2x512xf32>
    %c0_67 = arith.constant 0 : index
    %c0_68 = arith.constant 0 : index
    %204 = vector.load %arg3[%c0_67, %c0_68] : memref<128x512xbf16, #tpu.memory_space<vmem>>, vector<128x512xbf16>
    %cst_69 = arith.constant dense<0.000000e+00> : vector<2x512xf32>
    %205 = tpu.matmul %186, %204, %cst_69 {dimension_numbers = #tpu.dot_dimension_numbers<[1], [0], [0], [1], [0, 0, 1, 1], [], []>} : vector<2x128xbf16>, vector<128x512xbf16>, vector<2x512xf32> -> vector<2x512xf32>
    %206 = arith.addf %203, %205 : vector<2x512xf32>
    %207 = vector.extract_strided_slice %206 {offsets = [0, 0], sizes = [2, 384], strides = [1, 1]} : vector<2x512xf32> to vector<2x384xf32>
    %208 = arith.negf %207 : vector<2x384xf32>
    %209 = math.exp %208 : vector<2x384xf32>
    %cst_70 = arith.constant 1.000000e+00 : f32
    %210 = vector.broadcast %cst_70 : f32 to vector<2x384xf32>
    %211 = arith.addf %210, %209 : vector<2x384xf32>
    %212 = arith.divf %210, %211 : vector<2x384xf32>
    %213 = vector.extract_strided_slice %206 {offsets = [0, 384], sizes = [2, 128], strides = [1, 1]} : vector<2x512xf32> to vector<2x128xf32>
    %214 = math.tanh %213 : vector<2x128xf32>
    %215 = vector.extract_strided_slice %212 {offsets = [0, 0], sizes = [2, 128], strides = [1, 1]} : vector<2x384xf32> to vector<2x128xf32>
    %216 = vector.extract_strided_slice %212 {offsets = [0, 128], sizes = [2, 128], strides = [1, 1]} : vector<2x384xf32> to vector<2x128xf32>
    %217 = vector.extract_strided_slice %212 {offsets = [0, 256], sizes = [2, 128], strides = [1, 1]} : vector<2x384xf32> to vector<2x128xf32>
    %218 = arith.mulf %216, %183 : vector<2x128xf32>
    %219 = arith.mulf %215, %214 : vector<2x128xf32>
    %220 = arith.addf %218, %219 : vector<2x128xf32>
    %221 = math.tanh %220 : vector<2x128xf32>
    %222 = arith.mulf %217, %221 : vector<2x128xf32>
    %223 = arith.truncf %222 : vector<2x128xf32> to vector<2x128xbf16>
    %c6_i32 = arith.constant 6 : i32
    %224 = arith.index_cast %c6_i32 : i32 to index
    %c0_71 = arith.constant 0 : index
    %c0_72 = arith.constant 0 : index
    %225 = vector.load %arg0[%224, %c0_71, %c0_72] : memref<8x2x2xf32, #tpu.memory_space<vmem>>, vector<1x2x2xf32>
    %226 = vector.shape_cast %225 : vector<1x2x2xf32> to vector<2x2xf32>
    %c0_73 = arith.constant 0 : index
    %c0_74 = arith.constant 0 : index
    %227 = vector.load %arg2[%c0_73, %c0_74] : memref<1x512xf32, #tpu.memory_space<vmem>>, vector<1x512xf32>
    %228 = vector.extract_strided_slice %226 {offsets = [0, 0], sizes = [2, 1], strides = [1, 1]} : vector<2x2xf32> to vector<2x1xf32>
    %c0_75 = arith.constant 0 : index
    %c0_76 = arith.constant 0 : index
    %229 = vector.load %arg1[%c0_75, %c0_76] : memref<2x512xf32, #tpu.memory_space<vmem>>, vector<1x512xf32>
    %230 = vector.broadcast %228 : vector<2x1xf32> to vector<2x512xf32>
    %231 = vector.broadcast %229 : vector<1x512xf32> to vector<2x512xf32>
    %232 = arith.mulf %230, %231 : vector<2x512xf32>
    %233 = vector.broadcast %227 : vector<1x512xf32> to vector<2x512xf32>
    %234 = arith.addf %233, %232 : vector<2x512xf32>
    %235 = vector.extract_strided_slice %226 {offsets = [0, 1], sizes = [2, 1], strides = [1, 1]} : vector<2x2xf32> to vector<2x1xf32>
    %c1_77 = arith.constant 1 : index
    %c0_78 = arith.constant 0 : index
    %236 = vector.load %arg1[%c1_77, %c0_78] : memref<2x512xf32, #tpu.memory_space<vmem>>, vector<1x512xf32>
    %237 = vector.broadcast %235 : vector<2x1xf32> to vector<2x512xf32>
    %238 = vector.broadcast %236 : vector<1x512xf32> to vector<2x512xf32>
    %239 = arith.mulf %237, %238 : vector<2x512xf32>
    %240 = arith.addf %234, %239 : vector<2x512xf32>
    %c0_79 = arith.constant 0 : index
    %c0_80 = arith.constant 0 : index
    %241 = vector.load %arg3[%c0_79, %c0_80] : memref<128x512xbf16, #tpu.memory_space<vmem>>, vector<128x512xbf16>
    %cst_81 = arith.constant dense<0.000000e+00> : vector<2x512xf32>
    %242 = tpu.matmul %223, %241, %cst_81 {dimension_numbers = #tpu.dot_dimension_numbers<[1], [0], [0], [1], [0, 0, 1, 1], [], []>} : vector<2x128xbf16>, vector<128x512xbf16>, vector<2x512xf32> -> vector<2x512xf32>
    %243 = arith.addf %240, %242 : vector<2x512xf32>
    %244 = vector.extract_strided_slice %243 {offsets = [0, 0], sizes = [2, 384], strides = [1, 1]} : vector<2x512xf32> to vector<2x384xf32>
    %245 = arith.negf %244 : vector<2x384xf32>
    %246 = math.exp %245 : vector<2x384xf32>
    %cst_82 = arith.constant 1.000000e+00 : f32
    %247 = vector.broadcast %cst_82 : f32 to vector<2x384xf32>
    %248 = arith.addf %247, %246 : vector<2x384xf32>
    %249 = arith.divf %247, %248 : vector<2x384xf32>
    %250 = vector.extract_strided_slice %243 {offsets = [0, 384], sizes = [2, 128], strides = [1, 1]} : vector<2x512xf32> to vector<2x128xf32>
    %251 = math.tanh %250 : vector<2x128xf32>
    %252 = vector.extract_strided_slice %249 {offsets = [0, 0], sizes = [2, 128], strides = [1, 1]} : vector<2x384xf32> to vector<2x128xf32>
    %253 = vector.extract_strided_slice %249 {offsets = [0, 128], sizes = [2, 128], strides = [1, 1]} : vector<2x384xf32> to vector<2x128xf32>
    %254 = vector.extract_strided_slice %249 {offsets = [0, 256], sizes = [2, 128], strides = [1, 1]} : vector<2x384xf32> to vector<2x128xf32>
    %255 = arith.mulf %253, %220 : vector<2x128xf32>
    %256 = arith.mulf %252, %251 : vector<2x128xf32>
    %257 = arith.addf %255, %256 : vector<2x128xf32>
    %258 = math.tanh %257 : vector<2x128xf32>
    %259 = arith.mulf %254, %258 : vector<2x128xf32>
    %260 = arith.truncf %259 : vector<2x128xf32> to vector<2x128xbf16>
    %c7_i32 = arith.constant 7 : i32
    %261 = arith.index_cast %c7_i32 : i32 to index
    %c0_83 = arith.constant 0 : index
    %c0_84 = arith.constant 0 : index
    %262 = vector.load %arg0[%261, %c0_83, %c0_84] : memref<8x2x2xf32, #tpu.memory_space<vmem>>, vector<1x2x2xf32>
    %263 = vector.shape_cast %262 : vector<1x2x2xf32> to vector<2x2xf32>
    %c0_85 = arith.constant 0 : index
    %c0_86 = arith.constant 0 : index
    %264 = vector.load %arg2[%c0_85, %c0_86] : memref<1x512xf32, #tpu.memory_space<vmem>>, vector<1x512xf32>
    %265 = vector.extract_strided_slice %263 {offsets = [0, 0], sizes = [2, 1], strides = [1, 1]} : vector<2x2xf32> to vector<2x1xf32>
    %c0_87 = arith.constant 0 : index
    %c0_88 = arith.constant 0 : index
    %266 = vector.load %arg1[%c0_87, %c0_88] : memref<2x512xf32, #tpu.memory_space<vmem>>, vector<1x512xf32>
    %267 = vector.broadcast %265 : vector<2x1xf32> to vector<2x512xf32>
    %268 = vector.broadcast %266 : vector<1x512xf32> to vector<2x512xf32>
    %269 = arith.mulf %267, %268 : vector<2x512xf32>
    %270 = vector.broadcast %264 : vector<1x512xf32> to vector<2x512xf32>
    %271 = arith.addf %270, %269 : vector<2x512xf32>
    %272 = vector.extract_strided_slice %263 {offsets = [0, 1], sizes = [2, 1], strides = [1, 1]} : vector<2x2xf32> to vector<2x1xf32>
    %c1_89 = arith.constant 1 : index
    %c0_90 = arith.constant 0 : index
    %273 = vector.load %arg1[%c1_89, %c0_90] : memref<2x512xf32, #tpu.memory_space<vmem>>, vector<1x512xf32>
    %274 = vector.broadcast %272 : vector<2x1xf32> to vector<2x512xf32>
    %275 = vector.broadcast %273 : vector<1x512xf32> to vector<2x512xf32>
    %276 = arith.mulf %274, %275 : vector<2x512xf32>
    %277 = arith.addf %271, %276 : vector<2x512xf32>
    %c0_91 = arith.constant 0 : index
    %c0_92 = arith.constant 0 : index
    %278 = vector.load %arg3[%c0_91, %c0_92] : memref<128x512xbf16, #tpu.memory_space<vmem>>, vector<128x512xbf16>
    %cst_93 = arith.constant dense<0.000000e+00> : vector<2x512xf32>
    %279 = tpu.matmul %260, %278, %cst_93 {dimension_numbers = #tpu.dot_dimension_numbers<[1], [0], [0], [1], [0, 0, 1, 1], [], []>} : vector<2x128xbf16>, vector<128x512xbf16>, vector<2x512xf32> -> vector<2x512xf32>
    %280 = arith.addf %277, %279 : vector<2x512xf32>
    %281 = vector.extract_strided_slice %280 {offsets = [0, 0], sizes = [2, 384], strides = [1, 1]} : vector<2x512xf32> to vector<2x384xf32>
    %282 = arith.negf %281 : vector<2x384xf32>
    %283 = math.exp %282 : vector<2x384xf32>
    %cst_94 = arith.constant 1.000000e+00 : f32
    %284 = vector.broadcast %cst_94 : f32 to vector<2x384xf32>
    %285 = arith.addf %284, %283 : vector<2x384xf32>
    %286 = arith.divf %284, %285 : vector<2x384xf32>
    %287 = vector.extract_strided_slice %280 {offsets = [0, 384], sizes = [2, 128], strides = [1, 1]} : vector<2x512xf32> to vector<2x128xf32>
    %288 = math.tanh %287 : vector<2x128xf32>
    %289 = vector.extract_strided_slice %286 {offsets = [0, 0], sizes = [2, 128], strides = [1, 1]} : vector<2x384xf32> to vector<2x128xf32>
    %290 = vector.extract_strided_slice %286 {offsets = [0, 128], sizes = [2, 128], strides = [1, 1]} : vector<2x384xf32> to vector<2x128xf32>
    %291 = vector.extract_strided_slice %286 {offsets = [0, 256], sizes = [2, 128], strides = [1, 1]} : vector<2x384xf32> to vector<2x128xf32>
    %292 = arith.mulf %290, %257 : vector<2x128xf32>
    %293 = arith.mulf %289, %288 : vector<2x128xf32>
    %294 = arith.addf %292, %293 : vector<2x128xf32>
    %295 = math.tanh %294 : vector<2x128xf32>
    %296 = arith.mulf %291, %295 : vector<2x128xf32>
    %297 = arith.truncf %296 : vector<2x128xf32> to vector<2x128xbf16>
    %c8_i32 = arith.constant 8 : i32
    %298 = vector.extract_strided_slice %297 {offsets = [0, 0], sizes = [2, 64], strides = [1, 1]} : vector<2x128xbf16> to vector<2x64xbf16>
    %299 = arith.extf %298 : vector<2x64xbf16> to vector<2x64xf32>
    %c0_95 = arith.constant 0 : index
    %c0_96 = arith.constant 0 : index
    %300 = vector.load %arg4[%c0_95, %c0_96] : memref<64x128xf32, #tpu.memory_space<vmem>>, vector<64x128xf32>
    %cst_97 = arith.constant dense<0.000000e+00> : vector<2x128xf32>
    %301 = tpu.matmul %299, %300, %cst_97 {dimension_numbers = #tpu.dot_dimension_numbers<[1], [0], [0], [1], [0, 0, 1, 1], [], []>} : vector<2x64xf32>, vector<64x128xf32>, vector<2x128xf32> -> vector<2x128xf32>
    %c0_98 = arith.constant 0 : index
    %c0_99 = arith.constant 0 : index
    %302 = vector.load %arg5[%c0_98, %c0_99] : memref<1x128xf32, #tpu.memory_space<vmem>>, vector<1x128xf32>
    %303 = vector.broadcast %302 : vector<1x128xf32> to vector<2x128xf32>
    %304 = arith.addf %301, %303 : vector<2x128xf32>
    %cst_100 = arith.constant dense<0xFF800000> : vector<2xf32>
    %305 = vector.multi_reduction <maximumf>, %304, %cst_100 [1] : vector<2x128xf32> to vector<2xf32>
    %306 = vector.shape_cast %305 : vector<2xf32> to vector<2x1xf32>
    %307 = vector.broadcast %306 : vector<2x1xf32> to vector<2x128xf32>
    %308 = arith.subf %304, %307 : vector<2x128xf32>
    %309 = math.exp %308 : vector<2x128xf32>
    %cst_101 = arith.constant dense<0.000000e+00> : vector<2xf32>
    %310 = vector.multi_reduction <add>, %309, %cst_101 [1] : vector<2x128xf32> to vector<2xf32>
    %311 = vector.shape_cast %310 : vector<2xf32> to vector<2x1xf32>
    %312 = tpu.reciprocal %311 {approx = true} : vector<2x1xf32> -> vector<2x1xf32>
    %313 = vector.broadcast %312 : vector<2x1xf32> to vector<2x128xf32>
    %314 = arith.mulf %309, %313 : vector<2x128xf32>
    %c0_102 = arith.constant 0 : index
    %c0_103 = arith.constant 0 : index
    %315 = vector.load %arg6[%c0_102, %c0_103] : memref<2x128xf32, #tpu.memory_space<vmem>>, vector<2x128xf32>
    tpu.vector_store %arg6[%c0_102, %c0_103], %314 {strides = array<i32>} : memref<2x128xf32, #tpu.memory_space<vmem>>, vector<2x128xf32>,
    return
  }
}

</mosaic_0001>

<llo_original>
// kernel: lstm_model_2d_forward.1
$region0: #{lstm_model_2d_forward.1}
  #allocation0 [shape = 'u32[]', space=smem, size = 0x4, offset = 0x4, fixed_abs, tag = 'smem constant byte address 0x4 - core index']
  #allocation1 [shape = 'u32[144,128]{1,0:T(1,128)}', space=vmem, size = 0x12000, scoped, tag = 'internal scratch']
  %s0 = inlined_call_operand.vmem [shape: f32[8,2,2], index: 0, kind: input, shape index: {}]
  %s1 = inlined_call_operand.vmem [shape: f32[2,512], index: 1, kind: input, shape index: {}]
  %s2 = inlined_call_operand.vmem [shape: f32[1,512], index: 2, kind: input, shape index: {}]
  %s3 = inlined_call_operand.hbm [shape: bf16[128,512], index: 3, kind: input, shape index: {}]
  %s4 = inlined_call_operand.hbm [shape: f32[64,128], index: 4, kind: input, shape index: {}]
  %s5 = inlined_call_operand.vmem [shape: f32[1,128], index: 5, kind: input, shape index: {}]
  %s6 = inlined_call_operand.hbm [shape: f32[2,128], index: 6, kind: output, shape index: {}]
  %s7 = sld [smem:[#allocation0]]
  $region42: #{lstm_model_2d_forward.1} parent=0
    _
  %s9 = ssub.s32 1, %s7
  %s10 = scalar_select 0, %s9, %s7
  $region1: #{lstm_model_2d_forward.1} parent=0
    #allocation2 [shape = 'u8[131072]{0}', space=vmem, size = 0x20000, scoped, tag = 'input window, operand 3, single buffered']
    #allocation3 [shape = 's32[1]{0}', space=sflag, size = 0x4, scoped, tag = 'scoped memory for lstm_model_2d_forward.1']
    #allocation4 [shape = 's32[1]{0}', space=sflag, size = 0x4, scoped, tag = 'scoped memory for lstm_model_2d_forward.1']
    #allocation5 [shape = 'u8[32768]{0}', space=vmem, size = 0x8000, scoped, tag = 'input window, operand 4, single buffered']
    #allocation6 [shape = 's32[1]{0}', space=sflag, size = 0x4, scoped, tag = 'scoped memory for lstm_model_2d_forward.1']
    #allocation7 [shape = 'u8[1024]{0}', space=vmem, size = 0x400, scoped, tag = 'output window, operand 0, single buffered']
    %11 = vsyncpa [#allocation3], 0
    %12 = vsyncpa [#allocation6], 0
    %13 = vsyncpa [#allocation4], 0
    // Predicated region
    $region2: #{lstm_model_2d_forward.1} parent=1 // pred_check
      _
    $region3: #{lstm_model_2d_forward.1} parent=1 // pred_check_branch
      %15 = sbr.rel (0) target = $region5
    $region4: #{lstm_model_2d_forward.1} parent=1 // pred_region
      _
    $region5: #{lstm_model_2d_forward.1} parent=1 // pred_fallthru
      _
    // Predicated region
    $region6: #{lstm_model_2d_forward.1} parent=1 // pred_check
      _
    $region7: #{lstm_model_2d_forward.1} parent=1 // pred_check_branch
      %17 = sbr.rel (0) target = $region9
    $region8: #{lstm_model_2d_forward.1} parent=1 // pred_region
      _
    $region9: #{lstm_model_2d_forward.1} parent=1 // pred_fallthru
      _
    // Predicated region
    $region10: #{lstm_model_2d_forward.1} parent=1 // pred_check
      _
    $region11: #{lstm_model_2d_forward.1} parent=1 // pred_check_branch
      %19 = sbr.rel (0) target = $region13
    $region12: #{lstm_model_2d_forward.1} parent=1 // pred_region
      _
    $region13: #{lstm_model_2d_forward.1} parent=1 // pred_fallthru
      _
    // Predicated region
    $region14: #{lstm_model_2d_forward.1} parent=1 // pred_check
      _
    $region15: #{lstm_model_2d_forward.1} parent=1 // pred_check_branch
      %21 = sbr.rel (0) target = $region17
    $region16: #{lstm_model_2d_forward.1} parent=1 // pred_region
      %s23 = ssub.s32 4096, 4096
      %24 = vsyncadd [#allocation3], %s23
      %s25 = sshll.u32 [#allocation2], 4
      %s26 = int_to_ptr.vmem [resolvable:$true] %s25
      %31 = dma.hbm_to_vmem [thread:$0]  %s3, 4096, %s26, [#allocation3], 256, 256, 16
    $region17: #{lstm_model_2d_forward.1} parent=1 // pred_fallthru
      _
    // Predicated region
    $region18: #{lstm_model_2d_forward.1} parent=1 // pred_check
      _
    $region19: #{lstm_model_2d_forward.1} parent=1 // pred_check_branch
      %33 = sbr.rel (0) target = $region21
    $region20: #{lstm_model_2d_forward.1} parent=1 // pred_region
      %s35 = ssub.s32 1024, 1024
      %36 = vsyncadd [#allocation6], %s35
      %s37 = sshll.u32 [#allocation5], 4
      %s38 = int_to_ptr.vmem [resolvable:$true] %s37
      %43 = dma.hbm_to_vmem [thread:$0]  %s4, 1024, %s38, [#allocation6], 128, 128, 8
    $region21: #{lstm_model_2d_forward.1} parent=1 // pred_fallthru
      _
    // Predicated region
    $region22: #{lstm_model_2d_forward.1} parent=1 // pred_check
      _
    $region23: #{lstm_model_2d_forward.1} parent=1 // pred_check_branch
      %45 = sbr.rel (0) target = $region25
    $region24: #{lstm_model_2d_forward.1} parent=1 // pred_region
      _
    $region25: #{lstm_model_2d_forward.1} parent=1 // pred_fallthru
      _
    // Predicated region
    $region26: #{lstm_model_2d_forward.1} parent=1 // pred_check
      _
    $region27: #{lstm_model_2d_forward.1} parent=1 // pred_check_branch
      %47 = sbr.rel (0) target = $region29
    $region28: #{lstm_model_2d_forward.1} parent=1 // pred_region
      %48 = dma.done [#allocation3], 4096
    $region29: #{lstm_model_2d_forward.1} parent=1 // pred_fallthru
      _
    // Predicated region
    $region30: #{lstm_model_2d_forward.1} parent=1 // pred_check
      _
    $region31: #{lstm_model_2d_forward.1} parent=1 // pred_check_branch
      %50 = sbr.rel (0) target = $region33
    $region32: #{lstm_model_2d_forward.1} parent=1 // pred_region
      %51 = dma.done [#allocation6], 1024
    $region33: #{lstm_model_2d_forward.1} parent=1 // pred_fallthru
      _
    %v53 = vld [vmem:[%s0] sm:$0x3]
    %v54 = vld [vmem:[%s2] sm:$0xf]
    %v55 = vld [vmem:[%s1] ss:$2 sm:$0xf]
    %57 = vset.pattern.permute.xlu0 0
    %58 = vperm.xlu0 %57, %v53
    %v59 = vpop.permute.xlu0 %58
    %v62 = vlaneseq
    %v63 = vshrl.u32 %v62, 7
    %v64 = vsub.s32 0, %v63
    %v65 = vrot.slane %v55, %v64
    %v66 = vlaneseq
    %v67 = vshrl.u32 %v66, 7
    %v68 = vsub.s32 1, %v67
    %v69 = vrot.slane %v55, %v68
    %v70 = vlaneseq
    %v71 = vshrl.u32 %v70, 7
    %v72 = vsub.s32 2, %v71
    %v73 = vrot.slane %v55, %v72
    %v74 = vlaneseq
    %v75 = vshrl.u32 %v74, 7
    %v76 = vsub.s32 3, %v75
    %v77 = vrot.slane %v55, %v76
    %v82 = vmul.f32 %v59, %v65
    %v83 = vmul.f32 %v59, %v69
    %v84 = vmul.f32 %v59, %v73
    %v85 = vmul.f32 %v59, %v77
    %v87 = vlaneseq
    %v88 = vshrl.u32 %v87, 7
    %v89 = vsub.s32 0, %v88
    %v90 = vrot.slane %v54, %v89
    %v91 = vlaneseq
    %v92 = vshrl.u32 %v91, 7
    %v93 = vsub.s32 1, %v92
    %v94 = vrot.slane %v54, %v93
    %v95 = vlaneseq
    %v96 = vshrl.u32 %v95, 7
    %v97 = vsub.s32 2, %v96
    %v98 = vrot.slane %v54, %v97
    %v99 = vlaneseq
    %v100 = vshrl.u32 %v99, 7
    %v101 = vsub.s32 3, %v100
    %v102 = vrot.slane %v54, %v101
    %v107 = vadd.f32 %v90, %v82
    %v108 = vadd.f32 %v94, %v83
    %v109 = vadd.f32 %v98, %v84
    %v110 = vadd.f32 %v102, %v85
    %s111 = scalar_lea.vmem %s1, 1
    %v112 = vld [vmem:[%s111] ss:$2 sm:$0xf]
    %113 = vset.pattern.permute.xlu0 1
    %114 = vperm.xlu0 %113, %v53
    %v115 = vpop.permute.xlu0 %114
    %v118 = vlaneseq
    %v119 = vshrl.u32 %v118, 7
    %v120 = vsub.s32 0, %v119
    %v121 = vrot.slane %v112, %v120
    %v122 = vlaneseq
    %v123 = vshrl.u32 %v122, 7
    %v124 = vsub.s32 1, %v123
    %v125 = vrot.slane %v112, %v124
    %v126 = vlaneseq
    %v127 = vshrl.u32 %v126, 7
    %v128 = vsub.s32 2, %v127
    %v129 = vrot.slane %v112, %v128
    %v130 = vlaneseq
    %v131 = vshrl.u32 %v130, 7
    %v132 = vsub.s32 3, %v131
    %v133 = vrot.slane %v112, %v132
    %v138 = vmul.f32 %v115, %v121
    %v139 = vmul.f32 %v115, %v125
    %v140 = vmul.f32 %v115, %v129
    %v141 = vmul.f32 %v115, %v133
    %v142 = vadd.f32 %v107, %v138
    %v143 = vadd.f32 %v108, %v139
    %v144 = vadd.f32 %v109, %v140
    %v145 = vadd.f32 %v110, %v141
    %v146 = vld [vmem:[#allocation2] sm:$0xff]
    %v147 = vld [vmem:[#allocation2 + $0x8] sm:$0xff]
    %v148 = vld [vmem:[#allocation2 + $0x10] sm:$0xff]
    %v149 = vld [vmem:[#allocation2 + $0x18] sm:$0xff]
    %v150 = vld [vmem:[#allocation2 + $0x20] sm:$0xff]
    %v151 = vld [vmem:[#allocation2 + $0x28] sm:$0xff]
    %v152 = vld [vmem:[#allocation2 + $0x30] sm:$0xff]
    %v153 = vld [vmem:[#allocation2 + $0x38] sm:$0xff]
    %v154 = vld [vmem:[#allocation2 + $0x40] sm:$0xff]
    %v155 = vld [vmem:[#allocation2 + $0x48] sm:$0xff]
    %v156 = vld [vmem:[#allocation2 + $0x50] sm:$0xff]
    %v157 = vld [vmem:[#allocation2 + $0x58] sm:$0xff]
    %v158 = vld [vmem:[#allocation2 + $0x60] sm:$0xff]
    %v159 = vld [vmem:[#allocation2 + $0x68] sm:$0xff]
    %v160 = vld [vmem:[#allocation2 + $0x70] sm:$0xff]
    %v161 = vld [vmem:[#allocation2 + $0x78] sm:$0xff]
    %v162 = vld [vmem:[#allocation2 + $0x80] sm:$0xff]
    %v163 = vld [vmem:[#allocation2 + $0x88] sm:$0xff]
    %v164 = vld [vmem:[#allocation2 + $0x90] sm:$0xff]
    %v165 = vld [vmem:[#allocation2 + $0x98] sm:$0xff]
    %v166 = vld [vmem:[#allocation2 + $0xa0] sm:$0xff]
    %v167 = vld [vmem:[#allocation2 + $0xa8] sm:$0xff]
    %v168 = vld [vmem:[#allocation2 + $0xb0] sm:$0xff]
    %v169 = vld [vmem:[#allocation2 + $0xb8] sm:$0xff]
    %v170 = vld [vmem:[#allocation2 + $0xc0] sm:$0xff]
    %v171 = vld [vmem:[#allocation2 + $0xc8] sm:$0xff]
    %v172 = vld [vmem:[#allocation2 + $0xd0] sm:$0xff]
    %v173 = vld [vmem:[#allocation2 + $0xd8] sm:$0xff]
    %v174 = vld [vmem:[#allocation2 + $0xe0] sm:$0xff]
    %v175 = vld [vmem:[#allocation2 + $0xe8] sm:$0xff]
    %v176 = vld [vmem:[#allocation2 + $0xf0] sm:$0xff]
    %v177 = vld [vmem:[#allocation2 + $0xf8] sm:$0xff]
    %v210 = vunpack.c.l.b16 %v146
    %v211 = vunpack.c.h.b16 %v146
    %v212 = vunpack.c.l.b16 %v147
    %v213 = vunpack.c.h.b16 %v147
    %v214 = vunpack.c.l.b16 %v148
    %v215 = vunpack.c.h.b16 %v148
    %v216 = vunpack.c.l.b16 %v149
    %v217 = vunpack.c.h.b16 %v149
    %v218 = vunpack.c.l.b16 %v150
    %v219 = vunpack.c.h.b16 %v150
    %v220 = vunpack.c.l.b16 %v151
    %v221 = vunpack.c.h.b16 %v151
    %v222 = vunpack.c.l.b16 %v152
    %v223 = vunpack.c.h.b16 %v152
    %v224 = vunpack.c.l.b16 %v153
    %v225 = vunpack.c.h.b16 %v153
    %v226 = vunpack.c.l.b16 %v154
    %v227 = vunpack.c.h.b16 %v154
    %v228 = vunpack.c.l.b16 %v155
    %v229 = vunpack.c.h.b16 %v155
    %v230 = vunpack.c.l.b16 %v156
    %v231 = vunpack.c.h.b16 %v156
    %v232 = vunpack.c.l.b16 %v157
    %v233 = vunpack.c.h.b16 %v157
    %v234 = vunpack.c.l.b16 %v158
    %v235 = vunpack.c.h.b16 %v158
    %v236 = vunpack.c.l.b16 %v159
    %v237 = vunpack.c.h.b16 %v159
    %v238 = vunpack.c.l.b16 %v160
    %v239 = vunpack.c.h.b16 %v160
    %v240 = vunpack.c.l.b16 %v161
    %v241 = vunpack.c.h.b16 %v161
    %v242 = vunpack.c.l.b16 %v162
    %v243 = vunpack.c.h.b16 %v162
    %v244 = vunpack.c.l.b16 %v163
    %v245 = vunpack.c.h.b16 %v163
    %v246 = vunpack.c.l.b16 %v164
    %v247 = vunpack.c.h.b16 %v164
    %v248 = vunpack.c.l.b16 %v165
    %v249 = vunpack.c.h.b16 %v165
    %v250 = vunpack.c.l.b16 %v166
    %v251 = vunpack.c.h.b16 %v166
    %v252 = vunpack.c.l.b16 %v167
    %v253 = vunpack.c.h.b16 %v167
    %v254 = vunpack.c.l.b16 %v168
    %v255 = vunpack.c.h.b16 %v168
    %v256 = vunpack.c.l.b16 %v169
    %v257 = vunpack.c.h.b16 %v169
    %v258 = vunpack.c.l.b16 %v170
    %v259 = vunpack.c.h.b16 %v170
    %v260 = vunpack.c.l.b16 %v171
    %v261 = vunpack.c.h.b16 %v171
    %v262 = vunpack.c.l.b16 %v172
    %v263 = vunpack.c.h.b16 %v172
    %v264 = vunpack.c.l.b16 %v173
    %v265 = vunpack.c.h.b16 %v173
    %v266 = vunpack.c.l.b16 %v174
    %v267 = vunpack.c.h.b16 %v174
    %v268 = vunpack.c.l.b16 %v175
    %v269 = vunpack.c.h.b16 %v175
    %v270 = vunpack.c.l.b16 %v176
    %v271 = vunpack.c.h.b16 %v176
    %v272 = vunpack.c.l.b16 %v177
    %v273 = vunpack.c.h.b16 %v177
    %v274 = vpack.c.b16 %v214, %v210
    %v275 = vpack.c.b16 %v215, %v211
    %v276 = vpack.c.b16 %v216, %v212
    %v277 = vpack.c.b16 %v217, %v213
    %v278 = vpack.c.b16 %v222, %v218
    %v279 = vpack.c.b16 %v223, %v219
    %v280 = vpack.c.b16 %v224, %v220
    %v281 = vpack.c.b16 %v225, %v221
    %v282 = vpack.c.b16 %v230, %v226
    %v283 = vpack.c.b16 %v231, %v227
    %v284 = vpack.c.b16 %v232, %v228
    %v285 = vpack.c.b16 %v233, %v229
    %v286 = vpack.c.b16 %v238, %v234
    %v287 = vpack.c.b16 %v239, %v235
    %v288 = vpack.c.b16 %v240, %v236
    %v289 = vpack.c.b16 %v241, %v237
    %v290 = vpack.c.b16 %v246, %v242
    %v291 = vpack.c.b16 %v247, %v243
    %v292 = vpack.c.b16 %v248, %v244
    %v293 = vpack.c.b16 %v249, %v245
    %v294 = vpack.c.b16 %v254, %v250
    %v295 = vpack.c.b16 %v255, %v251
    %v296 = vpack.c.b16 %v256, %v252
    %v297 = vpack.c.b16 %v257, %v253
    %v298 = vpack.c.b16 %v262, %v258
    %v299 = vpack.c.b16 %v263, %v259
    %v300 = vpack.c.b16 %v264, %v260
    %v301 = vpack.c.b16 %v265, %v261
    %v302 = vpack.c.b16 %v270, %v266
    %v303 = vpack.c.b16 %v271, %v267
    %v304 = vpack.c.b16 %v272, %v268
    %v305 = vpack.c.b16 %v273, %v269
    %338 = vmatprep.subr.bf16.mxu0 %v303
    %339 = vmatpush1.bf16.msra.mxu0 %v302
    %340 = vmatprep.subr.bf16.mxu0 %v299
    %341 = vmatpush1.bf16.msra.mxu0 %v298
    %342 = vmatprep.subr.bf16.mxu0 %v295
    %343 = vmatpush1.bf16.msra.mxu0 %v294
    %344 = vmatprep.subr.bf16.mxu0 %v291
    %345 = vmatpush1.bf16.msra.mxu0 %v290
    %346 = vmatprep.subr.bf16.mxu0 %v287
    %347 = vmatpush1.bf16.msra.mxu0 %v286
    %348 = vmatprep.subr.bf16.mxu0 %v283
    %349 = vmatpush1.bf16.msra.mxu0 %v282
    %350 = vmatprep.subr.bf16.mxu0 %v279
    %351 = vmatpush1.bf16.msra.mxu0 %v278
    %352 = vmatprep.subr.bf16.mxu0 %v275
    %353 = vmatpush1.bf16.msra.mxu0 %v274
    %354 = vmatprep.subr.bf16.mxu0 0
    %355 = vmatpush2.bf16.msra.mxu0 0
    %356 = vmatprep.subr.bf16.mxu0 0
    %357 = vmatpush2.bf16.msra.mxu0 0
    %358 = vmatprep.subr.bf16.mxu0 0
    %359 = vmatpush2.bf16.msra.mxu0 0
    %360 = vmatprep.subr.bf16.mxu0 0
    %361 = vmatpush2.bf16.msra.mxu0 0
    %362 = vmatprep.subr.bf16.mxu0 0
    %363 = vmatpush2.bf16.msra.mxu0 0
    %364 = vmatprep.subr.bf16.mxu0 0
    %365 = vmatpush2.bf16.msra.mxu0 0
    %366 = vmatprep.subr.bf16.mxu0 0
    %367 = vmatpush2.bf16.msra.mxu0 0
    %368 = vmatprep.subr.bf16.mxu0 0
    %369 = vmatpush2.bf16.msra.mxu0 0
    %370 = vmatprep.mubr.bf16.mxu0 0
    %371 = vmatmul.mubr.bf16.gmra.mxu0 0
    %v372 = vpop.f32.mrf.mxu0
    %v373 = vadd.f32 0.0, %v372
    %v374 = vpop.f32.mrf.mxu0
    %v375 = vadd.f32 0.0, %v374
    %v376 = vpop.f32.mrf.mxu0
    %v377 = vpop.f32.mrf.mxu0
    %378 = vdwg.mxu0
    %379 = vmatprep.subr.bf16.mxu0 %v305
    %380 = vmatpush1.bf16.msra.mxu0 %v304
    %381 = vmatprep.subr.bf16.mxu0 %v301
    %382 = vmatpush1.bf16.msra.mxu0 %v300
    %383 = vmatprep.subr.bf16.mxu0 %v297
    %384 = vmatpush1.bf16.msra.mxu0 %v296
    %385 = vmatprep.subr.bf16.mxu0 %v293
    %386 = vmatpush1.bf16.msra.mxu0 %v292
    %387 = vmatprep.subr.bf16.mxu0 %v289
    %388 = vmatpush1.bf16.msra.mxu0 %v288
    %389 = vmatprep.subr.bf16.mxu0 %v285
    %390 = vmatpush1.bf16.msra.mxu0 %v284
    %391 = vmatprep.subr.bf16.mxu0 %v281
    %392 = vmatpush1.bf16.msra.mxu0 %v280
    %393 = vmatprep.subr.bf16.mxu0 %v277
    %394 = vmatpush1.bf16.msra.mxu0 %v276
    %395 = vmatprep.subr.bf16.mxu0 0
    %396 = vmatpush2.bf16.msra.mxu0 0
    %397 = vmatprep.subr.bf16.mxu0 0
    %398 = vmatpush2.bf16.msra.mxu0 0
    %399 = vmatprep.subr.bf16.mxu0 0
    %400 = vmatpush2.bf16.msra.mxu0 0
    %401 = vmatprep.subr.bf16.mxu0 0
    %402 = vmatpush2.bf16.msra.mxu0 0
    %403 = vmatprep.subr.bf16.mxu0 0
    %404 = vmatpush2.bf16.msra.mxu0 0
    %405 = vmatprep.subr.bf16.mxu0 0
    %406 = vmatpush2.bf16.msra.mxu0 0
    %407 = vmatprep.subr.bf16.mxu0 0
    %408 = vmatpush2.bf16.msra.mxu0 0
    %409 = vmatprep.subr.bf16.mxu0 0
    %410 = vmatpush2.bf16.msra.mxu0 0
    %411 = vmatprep.mubr.bf16.mxu0 0
    %412 = vmatmul.mubr.bf16.gmra.mxu0 0
    %v413 = vpop.f32.mrf.mxu0
    %v414 = vadd.f32 0.0, %v413
    %v415 = vpop.f32.mrf.mxu0
    %v416 = vadd.f32 0.0, %v415
    %v417 = vpop.f32.mrf.mxu0
    %v418 = vpop.f32.mrf.mxu0
    %419 = vdwg.mxu0
    %v420 = vadd.f32 %v142, %v373
    %v421 = vadd.f32 %v143, %v375
    %v422 = vadd.f32 %v144, %v414
    %v423 = vadd.f32 %v145, %v416
    %v424 = vxor.u32 %v420, 2147483648
    %v425 = vxor.u32 %v421, 2147483648
    %v426 = vxor.u32 %v422, 2147483648
    %v427 = vmul.f32 %v424, 1.442695
    %v428 = vpow.pop %v427
    %v429 = vmul.f32 %v425, 1.442695
    %v430 = vpow.pop %v429
    %v431 = vmul.f32 %v426, 1.442695
    %v432 = vpow.pop %v431
    %v433 = vadd.f32 %v428, 1.0
    %v434 = vadd.f32 %v430, 1.0
    %v435 = vadd.f32 %v432, 1.0
    %v436 = vrcp.pop %v433
    %v437 = vmul.f32 1.0, %v436
    %v438 = vrcp.pop %v434
    %v439 = vmul.f32 1.0, %v438
    %v440 = vrcp.pop %v435
    %v441 = vmul.f32 1.0, %v440
    %v442 = vtanh.pop %v423
    %v443 = vmul.f32 %v439, 0.0
    %v444 = vmul.f32 %v437, %v442
    %v445 = vadd.f32 %v443, %v444
    %v446 = vtanh.pop %v445
    %v447 = vmul.f32 %v441, %v446
    %v448 = vpack.c.bf16 %v447, %v447
    %s449 = scalar_lea.vmem %s0, 2
    %v450 = vld [vmem:[%s449] sm:$0x3]
    %452 = vset.pattern.permute.xlu0 0
    %453 = vperm.xlu0 %452, %v450
    %v454 = vpop.permute.xlu0 %453
    %v456 = vmul.f32 %v454, %v65
    %v457 = vmul.f32 %v454, %v69
    %v458 = vmul.f32 %v454, %v73
    %v459 = vmul.f32 %v454, %v77
    %v460 = vadd.f32 %v90, %v456
    %v461 = vadd.f32 %v94, %v457
    %v462 = vadd.f32 %v98, %v458
    %v463 = vadd.f32 %v102, %v459
    %464 = vset.pattern.permute.xlu0 1
    %465 = vperm.xlu0 %464, %v450
    %v466 = vpop.permute.xlu0 %465
    %v468 = vmul.f32 %v466, %v121
    %v469 = vmul.f32 %v466, %v125
    %v470 = vmul.f32 %v466, %v129
    %v471 = vmul.f32 %v466, %v133
    %v472 = vadd.f32 %v460, %v468
    %v473 = vadd.f32 %v461, %v469
    %v474 = vadd.f32 %v462, %v470
    %v475 = vadd.f32 %v463, %v471
    %476 = vmatprep.subr.bf16.mxu0 %v303
    %477 = vmatpush1.bf16.msra.mxu0 %v302
    %478 = vmatprep.subr.bf16.mxu0 %v299
    %479 = vmatpush1.bf16.msra.mxu0 %v298
    %480 = vmatprep.subr.bf16.mxu0 %v295
    %481 = vmatpush1.bf16.msra.mxu0 %v294
    %482 = vmatprep.subr.bf16.mxu0 %v291
    %483 = vmatpush1.bf16.msra.mxu0 %v290
    %484 = vmatprep.subr.bf16.mxu0 %v287
    %485 = vmatpush1.bf16.msra.mxu0 %v286
    %486 = vmatprep.subr.bf16.mxu0 %v283
    %487 = vmatpush1.bf16.msra.mxu0 %v282
    %488 = vmatprep.subr.bf16.mxu0 %v279
    %489 = vmatpush1.bf16.msra.mxu0 %v278
    %490 = vmatprep.subr.bf16.mxu0 %v275
    %491 = vmatpush1.bf16.msra.mxu0 %v274
    %492 = vmatprep.subr.bf16.mxu0 0
    %493 = vmatpush2.bf16.msra.mxu0 0
    %494 = vmatprep.subr.bf16.mxu0 0
    %495 = vmatpush2.bf16.msra.mxu0 0
    %496 = vmatprep.subr.bf16.mxu0 0
    %497 = vmatpush2.bf16.msra.mxu0 0
    %498 = vmatprep.subr.bf16.mxu0 0
    %499 = vmatpush2.bf16.msra.mxu0 0
    %500 = vmatprep.subr.bf16.mxu0 0
    %501 = vmatpush2.bf16.msra.mxu0 0
    %502 = vmatprep.subr.bf16.mxu0 0
    %503 = vmatpush2.bf16.msra.mxu0 0
    %504 = vmatprep.subr.bf16.mxu0 0
    %505 = vmatpush2.bf16.msra.mxu0 0
    %506 = vmatprep.subr.bf16.mxu0 0
    %507 = vmatpush2.bf16.msra.mxu0 0
    %508 = vmatprep.mubr.bf16.mxu0 0
    %509 = vmatmul.mubr.bf16.gmra.mxu0 %v448
    %v510 = vpop.f32.mrf.mxu0
    %v511 = vadd.f32 0.0, %v510
    %v512 = vpop.f32.mrf.mxu0
    %v513 = vadd.f32 0.0, %v512
    %v514 = vpop.f32.mrf.mxu0
    %v515 = vpop.f32.mrf.mxu0
    %516 = vdwg.mxu0
    %517 = vmatprep.subr.bf16.mxu0 %v305
    %518 = vmatpush1.bf16.msra.mxu0 %v304
    %519 = vmatprep.subr.bf16.mxu0 %v301
    %520 = vmatpush1.bf16.msra.mxu0 %v300
    %521 = vmatprep.subr.bf16.mxu0 %v297
    %522 = vmatpush1.bf16.msra.mxu0 %v296
    %523 = vmatprep.subr.bf16.mxu0 %v293
    %524 = vmatpush1.bf16.msra.mxu0 %v292
    %525 = vmatprep.subr.bf16.mxu0 %v289
    %526 = vmatpush1.bf16.msra.mxu0 %v288
    %527 = vmatprep.subr.bf16.mxu0 %v285
    %528 = vmatpush1.bf16.msra.mxu0 %v284
    %529 = vmatprep.subr.bf16.mxu0 %v281
    %530 = vmatpush1.bf16.msra.mxu0 %v280
    %531 = vmatprep.subr.bf16.mxu0 %v277
    %532 = vmatpush1.bf16.msra.mxu0 %v276
    %533 = vmatprep.subr.bf16.mxu0 0
    %534 = vmatpush2.bf16.msra.mxu0 0
    %535 = vmatprep.subr.bf16.mxu0 0
    %536 = vmatpush2.bf16.msra.mxu0 0
    %537 = vmatprep.subr.bf16.mxu0 0
    %538 = vmatpush2.bf16.msra.mxu0 0
    %539 = vmatprep.subr.bf16.mxu0 0
    %540 = vmatpush2.bf16.msra.mxu0 0
    %541 = vmatprep.subr.bf16.mxu0 0
    %542 = vmatpush2.bf16.msra.mxu0 0
    %543 = vmatprep.subr.bf16.mxu0 0
    %544 = vmatpush2.bf16.msra.mxu0 0
    %545 = vmatprep.subr.bf16.mxu0 0
    %546 = vmatpush2.bf16.msra.mxu0 0
    %547 = vmatprep.subr.bf16.mxu0 0
    %548 = vmatpush2.bf16.msra.mxu0 0
    %549 = vmatprep.mubr.bf16.mxu0 0
    %550 = vmatmul.mubr.bf16.gmra.mxu0 %v448
    %v551 = vpop.f32.mrf.mxu0
    %v552 = vadd.f32 0.0, %v551
    %v553 = vpop.f32.mrf.mxu0
    %v554 = vadd.f32 0.0, %v553
    %v555 = vpop.f32.mrf.mxu0
    %v556 = vpop.f32.mrf.mxu0
    %557 = vdwg.mxu0
    %v558 = vadd.f32 %v472, %v511
    %v559 = vadd.f32 %v473, %v513
    %v560 = vadd.f32 %v474, %v552
    %v561 = vadd.f32 %v475, %v554
    %v562 = vxor.u32 %v558, 2147483648
    %v563 = vxor.u32 %v559, 2147483648
    %v564 = vxor.u32 %v560, 2147483648
    %v565 = vmul.f32 %v562, 1.442695
    %v566 = vpow.pop %v565
    %v567 = vmul.f32 %v563, 1.442695
    %v568 = vpow.pop %v567
    %v569 = vmul.f32 %v564, 1.442695
    %v570 = vpow.pop %v569
    %v571 = vadd.f32 %v566, 1.0
    %v572 = vadd.f32 %v568, 1.0
    %v573 = vadd.f32 %v570, 1.0
    %v574 = vrcp.pop %v571
    %v575 = vmul.f32 1.0, %v574
    %v576 = vrcp.pop %v572
    %v577 = vmul.f32 1.0, %v576
    %v578 = vrcp.pop %v573
    %v579 = vmul.f32 1.0, %v578
    %v580 = vtanh.pop %v561
    %v581 = vmul.f32 %v577, %v445
    %v582 = vmul.f32 %v575, %v580
    %v583 = vadd.f32 %v581, %v582
    %v584 = vtanh.pop %v583
    %v585 = vmul.f32 %v579, %v584
    %v586 = vpack.c.bf16 %v585, %v585
    %s587 = scalar_lea.vmem %s0, 4
    %v588 = vld [vmem:[%s587] sm:$0x3]
    %590 = vset.pattern.permute.xlu0 0
    %591 = vperm.xlu0 %590, %v588
    %v592 = vpop.permute.xlu0 %591
    %v594 = vmul.f32 %v592, %v65
    %v595 = vmul.f32 %v592, %v69
    %v596 = vmul.f32 %v592, %v73
    %v597 = vmul.f32 %v592, %v77
    %v598 = vadd.f32 %v90, %v594
    %v599 = vadd.f32 %v94, %v595
    %v600 = vadd.f32 %v98, %v596
    %v601 = vadd.f32 %v102, %v597
    %602 = vset.pattern.permute.xlu0 1
    %603 = vperm.xlu0 %602, %v588
    %v604 = vpop.permute.xlu0 %603
    %v606 = vmul.f32 %v604, %v121
    %v607 = vmul.f32 %v604, %v125
    %v608 = vmul.f32 %v604, %v129
    %v609 = vmul.f32 %v604, %v133
    %v610 = vadd.f32 %v598, %v606
    %v611 = vadd.f32 %v599, %v607
    %v612 = vadd.f32 %v600, %v608
    %v613 = vadd.f32 %v601, %v609
    %614 = vmatprep.subr.bf16.mxu0 %v303
    %615 = vmatpush1.bf16.msra.mxu0 %v302
    %616 = vmatprep.subr.bf16.mxu0 %v299
    %617 = vmatpush1.bf16.msra.mxu0 %v298
    %618 = vmatprep.subr.bf16.mxu0 %v295
    %619 = vmatpush1.bf16.msra.mxu0 %v294
    %620 = vmatprep.subr.bf16.mxu0 %v291
    %621 = vmatpush1.bf16.msra.mxu0 %v290
    %622 = vmatprep.subr.bf16.mxu0 %v287
    %623 = vmatpush1.bf16.msra.mxu0 %v286
    %624 = vmatprep.subr.bf16.mxu0 %v283
    %625 = vmatpush1.bf16.msra.mxu0 %v282
    %626 = vmatprep.subr.bf16.mxu0 %v279
    %627 = vmatpush1.bf16.msra.mxu0 %v278
    %628 = vmatprep.subr.bf16.mxu0 %v275
    %629 = vmatpush1.bf16.msra.mxu0 %v274
    %630 = vmatprep.subr.bf16.mxu0 0
    %631 = vmatpush2.bf16.msra.mxu0 0
    %632 = vmatprep.subr.bf16.mxu0 0
    %633 = vmatpush2.bf16.msra.mxu0 0
    %634 = vmatprep.subr.bf16.mxu0 0
    %635 = vmatpush2.bf16.msra.mxu0 0
    %636 = vmatprep.subr.bf16.mxu0 0
    %637 = vmatpush2.bf16.msra.mxu0 0
    %638 = vmatprep.subr.bf16.mxu0 0
    %639 = vmatpush2.bf16.msra.mxu0 0
    %640 = vmatprep.subr.bf16.mxu0 0
    %641 = vmatpush2.bf16.msra.mxu0 0
    %642 = vmatprep.subr.bf16.mxu0 0
    %643 = vmatpush2.bf16.msra.mxu0 0
    %644 = vmatprep.subr.bf16.mxu0 0
    %645 = vmatpush2.bf16.msra.mxu0 0
    %646 = vmatprep.mubr.bf16.mxu0 0
    %647 = vmatmul.mubr.bf16.gmra.mxu0 %v586
    %v648 = vpop.f32.mrf.mxu0
    %v649 = vadd.f32 0.0, %v648
    %v650 = vpop.f32.mrf.mxu0
    %v651 = vadd.f32 0.0, %v650
    %v652 = vpop.f32.mrf.mxu0
    %v653 = vpop.f32.mrf.mxu0
    %654 = vdwg.mxu0
    %655 = vmatprep.subr.bf16.mxu0 %v305
    %656 = vmatpush1.bf16.msra.mxu0 %v304
    %657 = vmatprep.subr.bf16.mxu0 %v301
    %658 = vmatpush1.bf16.msra.mxu0 %v300
    %659 = vmatprep.subr.bf16.mxu0 %v297
    %660 = vmatpush1.bf16.msra.mxu0 %v296
    %661 = vmatprep.subr.bf16.mxu0 %v293
    %662 = vmatpush1.bf16.msra.mxu0 %v292
    %663 = vmatprep.subr.bf16.mxu0 %v289
    %664 = vmatpush1.bf16.msra.mxu0 %v288
    %665 = vmatprep.subr.bf16.mxu0 %v285
    %666 = vmatpush1.bf16.msra.mxu0 %v284
    %667 = vmatprep.subr.bf16.mxu0 %v281
    %668 = vmatpush1.bf16.msra.mxu0 %v280
    %669 = vmatprep.subr.bf16.mxu0 %v277
    %670 = vmatpush1.bf16.msra.mxu0 %v276
    %671 = vmatprep.subr.bf16.mxu0 0
    %672 = vmatpush2.bf16.msra.mxu0 0
    %673 = vmatprep.subr.bf16.mxu0 0
    %674 = vmatpush2.bf16.msra.mxu0 0
    %675 = vmatprep.subr.bf16.mxu0 0
    %676 = vmatpush2.bf16.msra.mxu0 0
    %677 = vmatprep.subr.bf16.mxu0 0
    %678 = vmatpush2.bf16.msra.mxu0 0
    %679 = vmatprep.subr.bf16.mxu0 0
    %680 = vmatpush2.bf16.msra.mxu0 0
    %681 = vmatprep.subr.bf16.mxu0 0
    %682 = vmatpush2.bf16.msra.mxu0 0
    %683 = vmatprep.subr.bf16.mxu0 0
    %684 = vmatpush2.bf16.msra.mxu0 0
    %685 = vmatprep.subr.bf16.mxu0 0
    %686 = vmatpush2.bf16.msra.mxu0 0
    %687 = vmatprep.mubr.bf16.mxu0 0
    %688 = vmatmul.mubr.bf16.gmra.mxu0 %v586
    %v689 = vpop.f32.mrf.mxu0
    %v690 = vadd.f32 0.0, %v689
    %v691 = vpop.f32.mrf.mxu0
    %v692 = vadd.f32 0.0, %v691
    %v693 = vpop.f32.mrf.mxu0
    %v694 = vpop.f32.mrf.mxu0
    %695 = vdwg.mxu0
    %v696 = vadd.f32 %v610, %v649
    %v697 = vadd.f32 %v611, %v651
    %v698 = vadd.f32 %v612, %v690
    %v699 = vadd.f32 %v613, %v692
    %v700 = vxor.u32 %v696, 2147483648
    %v701 = vxor.u32 %v697, 2147483648
    %v702 = vxor.u32 %v698, 2147483648
    %v703 = vmul.f32 %v700, 1.442695
    %v704 = vpow.pop %v703
    %v705 = vmul.f32 %v701, 1.442695
    %v706 = vpow.pop %v705
    %v707 = vmul.f32 %v702, 1.442695
    %v708 = vpow.pop %v707
    %v709 = vadd.f32 %v704, 1.0
    %v710 = vadd.f32 %v706, 1.0
    %v711 = vadd.f32 %v708, 1.0
    %v712 = vrcp.pop %v709
    %v713 = vmul.f32 1.0, %v712
    %v714 = vrcp.pop %v710
    %v715 = vmul.f32 1.0, %v714
    %v716 = vrcp.pop %v711
    %v717 = vmul.f32 1.0, %v716
    %v718 = vtanh.pop %v699
    %v719 = vmul.f32 %v715, %v583
    %v720 = vmul.f32 %v713, %v718
    %v721 = vadd.f32 %v719, %v720
    %v722 = vtanh.pop %v721
    %v723 = vmul.f32 %v717, %v722
    %v724 = vpack.c.bf16 %v723, %v723
    %s725 = scalar_lea.vmem %s0, 6
    %v726 = vld [vmem:[%s725] sm:$0x3]
    %728 = vset.pattern.permute.xlu0 0
    %729 = vperm.xlu0 %728, %v726
    %v730 = vpop.permute.xlu0 %729
    %v732 = vmul.f32 %v730, %v65
    %v733 = vmul.f32 %v730, %v69
    %v734 = vmul.f32 %v730, %v73
    %v735 = vmul.f32 %v730, %v77
    %v736 = vadd.f32 %v90, %v732
    %v737 = vadd.f32 %v94, %v733
    %v738 = vadd.f32 %v98, %v734
    %v739 = vadd.f32 %v102, %v735
    %740 = vset.pattern.permute.xlu0 1
    %741 = vperm.xlu0 %740, %v726
    %v742 = vpop.permute.xlu0 %741
    %v744 = vmul.f32 %v742, %v121
    %v745 = vmul.f32 %v742, %v125
    %v746 = vmul.f32 %v742, %v129
    %v747 = vmul.f32 %v742, %v133
    %v748 = vadd.f32 %v736, %v744
    %v749 = vadd.f32 %v737, %v745
    %v750 = vadd.f32 %v738, %v746
    %v751 = vadd.f32 %v739, %v747
    %752 = vmatprep.subr.bf16.mxu0 %v303
    %753 = vmatpush1.bf16.msra.mxu0 %v302
    %754 = vmatprep.subr.bf16.mxu0 %v299
    %755 = vmatpush1.bf16.msra.mxu0 %v298
    %756 = vmatprep.subr.bf16.mxu0 %v295
    %757 = vmatpush1.bf16.msra.mxu0 %v294
    %758 = vmatprep.subr.bf16.mxu0 %v291
    %759 = vmatpush1.bf16.msra.mxu0 %v290
    %760 = vmatprep.subr.bf16.mxu0 %v287
    %761 = vmatpush1.bf16.msra.mxu0 %v286
    %762 = vmatprep.subr.bf16.mxu0 %v283
    %763 = vmatpush1.bf16.msra.mxu0 %v282
    %764 = vmatprep.subr.bf16.mxu0 %v279
    %765 = vmatpush1.bf16.msra.mxu0 %v278
    %766 = vmatprep.subr.bf16.mxu0 %v275
    %767 = vmatpush1.bf16.msra.mxu0 %v274
    %768 = vmatprep.subr.bf16.mxu0 0
    %769 = vmatpush2.bf16.msra.mxu0 0
    %770 = vmatprep.subr.bf16.mxu0 0
    %771 = vmatpush2.bf16.msra.mxu0 0
    %772 = vmatprep.subr.bf16.mxu0 0
    %773 = vmatpush2.bf16.msra.mxu0 0
    %774 = vmatprep.subr.bf16.mxu0 0
    %775 = vmatpush2.bf16.msra.mxu0 0
    %776 = vmatprep.subr.bf16.mxu0 0
    %777 = vmatpush2.bf16.msra.mxu0 0
    %778 = vmatprep.subr.bf16.mxu0 0
    %779 = vmatpush2.bf16.msra.mxu0 0
    %780 = vmatprep.subr.bf16.mxu0 0
    %781 = vmatpush2.bf16.msra.mxu0 0
    %782 = vmatprep.subr.bf16.mxu0 0
    %783 = vmatpush2.bf16.msra.mxu0 0
    %784 = vmatprep.mubr.bf16.mxu0 0
    %785 = vmatmul.mubr.bf16.gmra.mxu0 %v724
    %v786 = vpop.f32.mrf.mxu0
    %v787 = vadd.f32 0.0, %v786
    %v788 = vpop.f32.mrf.mxu0
    %v789 = vadd.f32 0.0, %v788
    %v790 = vpop.f32.mrf.mxu0
    %v791 = vpop.f32.mrf.mxu0
    %792 = vdwg.mxu0
    %793 = vmatprep.subr.bf16.mxu0 %v305
    %794 = vmatpush1.bf16.msra.mxu0 %v304
    %795 = vmatprep.subr.bf16.mxu0 %v301
    %796 = vmatpush1.bf16.msra.mxu0 %v300
    %797 = vmatprep.subr.bf16.mxu0 %v297
    %798 = vmatpush1.bf16.msra.mxu0 %v296
    %799 = vmatprep.subr.bf16.mxu0 %v293
    %800 = vmatpush1.bf16.msra.mxu0 %v292
    %801 = vmatprep.subr.bf16.mxu0 %v289
    %802 = vmatpush1.bf16.msra.mxu0 %v288
    %803 = vmatprep.subr.bf16.mxu0 %v285
    %804 = vmatpush1.bf16.msra.mxu0 %v284
    %805 = vmatprep.subr.bf16.mxu0 %v281
    %806 = vmatpush1.bf16.msra.mxu0 %v280
    %807 = vmatprep.subr.bf16.mxu0 %v277
    %808 = vmatpush1.bf16.msra.mxu0 %v276
    %809 = vmatprep.subr.bf16.mxu0 0
    %810 = vmatpush2.bf16.msra.mxu0 0
    %811 = vmatprep.subr.bf16.mxu0 0
    %812 = vmatpush2.bf16.msra.mxu0 0
    %813 = vmatprep.subr.bf16.mxu0 0
    %814 = vmatpush2.bf16.msra.mxu0 0
    %815 = vmatprep.subr.bf16.mxu0 0
    %816 = vmatpush2.bf16.msra.mxu0 0
    %817 = vmatprep.subr.bf16.mxu0 0
    %818 = vmatpush2.bf16.msra.mxu0 0
    %819 = vmatprep.subr.bf16.mxu0 0
    %820 = vmatpush2.bf16.msra.mxu0 0
    %821 = vmatprep.subr.bf16.mxu0 0
    %822 = vmatpush2.bf16.msra.mxu0 0
    %823 = vmatprep.subr.bf16.mxu0 0
    %824 = vmatpush2.bf16.msra.mxu0 0
    %825 = vmatprep.mubr.bf16.mxu0 0
    %826 = vmatmul.mubr.bf16.gmra.mxu0 %v724
    %v827 = vpop.f32.mrf.mxu0
    %v828 = vadd.f32 0.0, %v827
    %v829 = vpop.f32.mrf.mxu0
    %v830 = vadd.f32 0.0, %v829
    %v831 = vpop.f32.mrf.mxu0
    %v832 = vpop.f32.mrf.mxu0
    %833 = vdwg.mxu0
    %v834 = vadd.f32 %v748, %v787
    %v835 = vadd.f32 %v749, %v789
    %v836 = vadd.f32 %v750, %v828
    %v837 = vadd.f32 %v751, %v830
    %v838 = vxor.u32 %v834, 2147483648
    %v839 = vxor.u32 %v835, 2147483648
    %v840 = vxor.u32 %v836, 2147483648
    %v841 = vmul.f32 %v838, 1.442695
    %v842 = vpow.pop %v841
    %v843 = vmul.f32 %v839, 1.442695
    %v844 = vpow.pop %v843
    %v845 = vmul.f32 %v840, 1.442695
    %v846 = vpow.pop %v845
    %v847 = vadd.f32 %v842, 1.0
    %v848 = vadd.f32 %v844, 1.0
    %v849 = vadd.f32 %v846, 1.0
    %v850 = vrcp.pop %v847
    %v851 = vmul.f32 1.0, %v850
    %v852 = vrcp.pop %v848
    %v853 = vmul.f32 1.0, %v852
    %v854 = vrcp.pop %v849
    %v855 = vmul.f32 1.0, %v854
    %v856 = vtanh.pop %v837
    %v857 = vmul.f32 %v853, %v721
    %v858 = vmul.f32 %v851, %v856
    %v859 = vadd.f32 %v857, %v858
    %v860 = vtanh.pop %v859
    %v861 = vmul.f32 %v855, %v860
    %v862 = vpack.c.bf16 %v861, %v861
    %s863 = scalar_lea.vmem %s0, 8
    %v864 = vld [vmem:[%s863] sm:$0x3]
    %866 = vset.pattern.permute.xlu0 0
    %867 = vperm.xlu0 %866, %v864
    %v868 = vpop.permute.xlu0 %867
    %v870 = vmul.f32 %v868, %v65
    %v871 = vmul.f32 %v868, %v69
    %v872 = vmul.f32 %v868, %v73
    %v873 = vmul.f32 %v868, %v77
    %v874 = vadd.f32 %v90, %v870
    %v875 = vadd.f32 %v94, %v871
    %v876 = vadd.f32 %v98, %v872
    %v877 = vadd.f32 %v102, %v873
    %878 = vset.pattern.permute.xlu0 1
    %879 = vperm.xlu0 %878, %v864
    %v880 = vpop.permute.xlu0 %879
    %v882 = vmul.f32 %v880, %v121
    %v883 = vmul.f32 %v880, %v125
    %v884 = vmul.f32 %v880, %v129
    %v885 = vmul.f32 %v880, %v133
    %v886 = vadd.f32 %v874, %v882
    %v887 = vadd.f32 %v875, %v883
    %v888 = vadd.f32 %v876, %v884
    %v889 = vadd.f32 %v877, %v885
    %890 = vmatprep.subr.bf16.mxu0 %v303
    %891 = vmatpush1.bf16.msra.mxu0 %v302
    %892 = vmatprep.subr.bf16.mxu0 %v299
    %893 = vmatpush1.bf16.msra.mxu0 %v298
    %894 = vmatprep.subr.bf16.mxu0 %v295
    %895 = vmatpush1.bf16.msra.mxu0 %v294
    %896 = vmatprep.subr.bf16.mxu0 %v291
    %897 = vmatpush1.bf16.msra.mxu0 %v290
    %898 = vmatprep.subr.bf16.mxu0 %v287
    %899 = vmatpush1.bf16.msra.mxu0 %v286
    %900 = vmatprep.subr.bf16.mxu0 %v283
    %901 = vmatpush1.bf16.msra.mxu0 %v282
    %902 = vmatprep.subr.bf16.mxu0 %v279
    %903 = vmatpush1.bf16.msra.mxu0 %v278
    %904 = vmatprep.subr.bf16.mxu0 %v275
    %905 = vmatpush1.bf16.msra.mxu0 %v274
    %906 = vmatprep.subr.bf16.mxu0 0
    %907 = vmatpush2.bf16.msra.mxu0 0
    %908 = vmatprep.subr.bf16.mxu0 0
    %909 = vmatpush2.bf16.msra.mxu0 0
    %910 = vmatprep.subr.bf16.mxu0 0
    %911 = vmatpush2.bf16.msra.mxu0 0
    %912 = vmatprep.subr.bf16.mxu0 0
    %913 = vmatpush2.bf16.msra.mxu0 0
    %914 = vmatprep.subr.bf16.mxu0 0
    %915 = vmatpush2.bf16.msra.mxu0 0
    %916 = vmatprep.subr.bf16.mxu0 0
    %917 = vmatpush2.bf16.msra.mxu0 0
    %918 = vmatprep.subr.bf16.mxu0 0
    %919 = vmatpush2.bf16.msra.mxu0 0
    %920 = vmatprep.subr.bf16.mxu0 0
    %921 = vmatpush2.bf16.msra.mxu0 0
    %922 = vmatprep.mubr.bf16.mxu0 0
    %923 = vmatmul.mubr.bf16.gmra.mxu0 %v862
    %v924 = vpop.f32.mrf.mxu0
    %v925 = vadd.f32 0.0, %v924
    %v926 = vpop.f32.mrf.mxu0
    %v927 = vadd.f32 0.0, %v926
    %v928 = vpop.f32.mrf.mxu0
    %v929 = vpop.f32.mrf.mxu0
    %930 = vdwg.mxu0
    %931 = vmatprep.subr.bf16.mxu0 %v305
    %932 = vmatpush1.bf16.msra.mxu0 %v304
    %933 = vmatprep.subr.bf16.mxu0 %v301
    %934 = vmatpush1.bf16.msra.mxu0 %v300
    %935 = vmatprep.subr.bf16.mxu0 %v297
    %936 = vmatpush1.bf16.msra.mxu0 %v296
    %937 = vmatprep.subr.bf16.mxu0 %v293
    %938 = vmatpush1.bf16.msra.mxu0 %v292
    %939 = vmatprep.subr.bf16.mxu0 %v289
    %940 = vmatpush1.bf16.msra.mxu0 %v288
    %941 = vmatprep.subr.bf16.mxu0 %v285
    %942 = vmatpush1.bf16.msra.mxu0 %v284
    %943 = vmatprep.subr.bf16.mxu0 %v281
    %944 = vmatpush1.bf16.msra.mxu0 %v280
    %945 = vmatprep.subr.bf16.mxu0 %v277
    %946 = vmatpush1.bf16.msra.mxu0 %v276
    %947 = vmatprep.subr.bf16.mxu0 0
    %948 = vmatpush2.bf16.msra.mxu0 0
    %949 = vmatprep.subr.bf16.mxu0 0
    %950 = vmatpush2.bf16.msra.mxu0 0
    %951 = vmatprep.subr.bf16.mxu0 0
    %952 = vmatpush2.bf16.msra.mxu0 0
    %953 = vmatprep.subr.bf16.mxu0 0
    %954 = vmatpush2.bf16.msra.mxu0 0
    %955 = vmatprep.subr.bf16.mxu0 0
    %956 = vmatpush2.bf16.msra.mxu0 0
    %957 = vmatprep.subr.bf16.mxu0 0
    %958 = vmatpush2.bf16.msra.mxu0 0
    %959 = vmatprep.subr.bf16.mxu0 0
    %960 = vmatpush2.bf16.msra.mxu0 0
    %961 = vmatprep.subr.bf16.mxu0 0
    %962 = vmatpush2.bf16.msra.mxu0 0
    %963 = vmatprep.mubr.bf16.mxu0 0
    %964 = vmatmul.mubr.bf16.gmra.mxu0 %v862
    %v965 = vpop.f32.mrf.mxu0
    %v966 = vadd.f32 0.0, %v965
    %v967 = vpop.f32.mrf.mxu0
    %v968 = vadd.f32 0.0, %v967
    %v969 = vpop.f32.mrf.mxu0
    %v970 = vpop.f32.mrf.mxu0
    %971 = vdwg.mxu0
    %v972 = vadd.f32 %v886, %v925
    %v973 = vadd.f32 %v887, %v927
    %v974 = vadd.f32 %v888, %v966
    %v975 = vadd.f32 %v889, %v968
    %v976 = vxor.u32 %v972, 2147483648
    %v977 = vxor.u32 %v973, 2147483648
    %v978 = vxor.u32 %v974, 2147483648
    %v979 = vmul.f32 %v976, 1.442695
    %v980 = vpow.pop %v979
    %v981 = vmul.f32 %v977, 1.442695
    %v982 = vpow.pop %v981
    %v983 = vmul.f32 %v978, 1.442695
    %v984 = vpow.pop %v983
    %v985 = vadd.f32 %v980, 1.0
    %v986 = vadd.f32 %v982, 1.0
    %v987 = vadd.f32 %v984, 1.0
    %v988 = vrcp.pop %v985
    %v989 = vmul.f32 1.0, %v988
    %v990 = vrcp.pop %v986
    %v991 = vmul.f32 1.0, %v990
    %v992 = vrcp.pop %v987
    %v993 = vmul.f32 1.0, %v992
    %v994 = vtanh.pop %v975
    %v995 = vmul.f32 %v991, %v859
    %v996 = vmul.f32 %v989, %v994
    %v997 = vadd.f32 %v995, %v996
    %v998 = vtanh.pop %v997
    %v999 = vmul.f32 %v993, %v998
    %v1000 = vpack.c.bf16 %v999, %v999
    %s1001 = scalar_lea.vmem %s0, 10
    %v1002 = vld [vmem:[%s1001] sm:$0x3]
    %1004 = vset.pattern.permute.xlu0 0
    %1005 = vperm.xlu0 %1004, %v1002
    %v1006 = vpop.permute.xlu0 %1005
    %v1008 = vmul.f32 %v1006, %v65
    %v1009 = vmul.f32 %v1006, %v69
    %v1010 = vmul.f32 %v1006, %v73
    %v1011 = vmul.f32 %v1006, %v77
    %v1012 = vadd.f32 %v90, %v1008
    %v1013 = vadd.f32 %v94, %v1009
    %v1014 = vadd.f32 %v98, %v1010
    %v1015 = vadd.f32 %v102, %v1011
    %1016 = vset.pattern.permute.xlu0 1
    %1017 = vperm.xlu0 %1016, %v1002
    %v1018 = vpop.permute.xlu0 %1017
    %v1020 = vmul.f32 %v1018, %v121
    %v1021 = vmul.f32 %v1018, %v125
    %v1022 = vmul.f32 %v1018, %v129
    %v1023 = vmul.f32 %v1018, %v133
    %v1024 = vadd.f32 %v1012, %v1020
    %v1025 = vadd.f32 %v1013, %v1021
    %v1026 = vadd.f32 %v1014, %v1022
    %v1027 = vadd.f32 %v1015, %v1023
    %1028 = vmatprep.subr.bf16.mxu0 %v303
    %1029 = vmatpush1.bf16.msra.mxu0 %v302
    %1030 = vmatprep.subr.bf16.mxu0 %v299
    %1031 = vmatpush1.bf16.msra.mxu0 %v298
    %1032 = vmatprep.subr.bf16.mxu0 %v295
    %1033 = vmatpush1.bf16.msra.mxu0 %v294
    %1034 = vmatprep.subr.bf16.mxu0 %v291
    %1035 = vmatpush1.bf16.msra.mxu0 %v290
    %1036 = vmatprep.subr.bf16.mxu0 %v287
    %1037 = vmatpush1.bf16.msra.mxu0 %v286
    %1038 = vmatprep.subr.bf16.mxu0 %v283
    %1039 = vmatpush1.bf16.msra.mxu0 %v282
    %1040 = vmatprep.subr.bf16.mxu0 %v279
    %1041 = vmatpush1.bf16.msra.mxu0 %v278
    %1042 = vmatprep.subr.bf16.mxu0 %v275
    %1043 = vmatpush1.bf16.msra.mxu0 %v274
    %1044 = vmatprep.subr.bf16.mxu0 0
    %1045 = vmatpush2.bf16.msra.mxu0 0
    %1046 = vmatprep.subr.bf16.mxu0 0
    %1047 = vmatpush2.bf16.msra.mxu0 0
    %1048 = vmatprep.subr.bf16.mxu0 0
    %1049 = vmatpush2.bf16.msra.mxu0 0
    %1050 = vmatprep.subr.bf16.mxu0 0
    %1051 = vmatpush2.bf16.msra.mxu0 0
    %1052 = vmatprep.subr.bf16.mxu0 0
    %1053 = vmatpush2.bf16.msra.mxu0 0
    %1054 = vmatprep.subr.bf16.mxu0 0
    %1055 = vmatpush2.bf16.msra.mxu0 0
    %1056 = vmatprep.subr.bf16.mxu0 0
    %1057 = vmatpush2.bf16.msra.mxu0 0
    %1058 = vmatprep.subr.bf16.mxu0 0
    %1059 = vmatpush2.bf16.msra.mxu0 0
    %1060 = vmatprep.mubr.bf16.mxu0 0
    %1061 = vmatmul.mubr.bf16.gmra.mxu0 %v1000
    %v1062 = vpop.f32.mrf.mxu0
    %v1063 = vadd.f32 0.0, %v1062
    %v1064 = vpop.f32.mrf.mxu0
    %v1065 = vadd.f32 0.0, %v1064
    %v1066 = vpop.f32.mrf.mxu0
    %v1067 = vpop.f32.mrf.mxu0
    %1068 = vdwg.mxu0
    %1069 = vmatprep.subr.bf16.mxu0 %v305
    %1070 = vmatpush1.bf16.msra.mxu0 %v304
    %1071 = vmatprep.subr.bf16.mxu0 %v301
    %1072 = vmatpush1.bf16.msra.mxu0 %v300
    %1073 = vmatprep.subr.bf16.mxu0 %v297
    %1074 = vmatpush1.bf16.msra.mxu0 %v296
    %1075 = vmatprep.subr.bf16.mxu0 %v293
    %1076 = vmatpush1.bf16.msra.mxu0 %v292
    %1077 = vmatprep.subr.bf16.mxu0 %v289
    %1078 = vmatpush1.bf16.msra.mxu0 %v288
    %1079 = vmatprep.subr.bf16.mxu0 %v285
    %1080 = vmatpush1.bf16.msra.mxu0 %v284
    %1081 = vmatprep.subr.bf16.mxu0 %v281
    %1082 = vmatpush1.bf16.msra.mxu0 %v280
    %1083 = vmatprep.subr.bf16.mxu0 %v277
    %1084 = vmatpush1.bf16.msra.mxu0 %v276
    %1085 = vmatprep.subr.bf16.mxu0 0
    %1086 = vmatpush2.bf16.msra.mxu0 0
    %1087 = vmatprep.subr.bf16.mxu0 0
    %1088 = vmatpush2.bf16.msra.mxu0 0
    %1089 = vmatprep.subr.bf16.mxu0 0
    %1090 = vmatpush2.bf16.msra.mxu0 0
    %1091 = vmatprep.subr.bf16.mxu0 0
    %1092 = vmatpush2.bf16.msra.mxu0 0
    %1093 = vmatprep.subr.bf16.mxu0 0
    %1094 = vmatpush2.bf16.msra.mxu0 0
    %1095 = vmatprep.subr.bf16.mxu0 0
    %1096 = vmatpush2.bf16.msra.mxu0 0
    %1097 = vmatprep.subr.bf16.mxu0 0
    %1098 = vmatpush2.bf16.msra.mxu0 0
    %1099 = vmatprep.subr.bf16.mxu0 0
    %1100 = vmatpush2.bf16.msra.mxu0 0
    %1101 = vmatprep.mubr.bf16.mxu0 0
    %1102 = vmatmul.mubr.bf16.gmra.mxu0 %v1000
    %v1103 = vpop.f32.mrf.mxu0
    %v1104 = vadd.f32 0.0, %v1103
    %v1105 = vpop.f32.mrf.mxu0
    %v1106 = vadd.f32 0.0, %v1105
    %v1107 = vpop.f32.mrf.mxu0
    %v1108 = vpop.f32.mrf.mxu0
    %1109 = vdwg.mxu0
    %v1110 = vadd.f32 %v1024, %v1063
    %v1111 = vadd.f32 %v1025, %v1065
    %v1112 = vadd.f32 %v1026, %v1104
    %v1113 = vadd.f32 %v1027, %v1106
    %v1114 = vxor.u32 %v1110, 2147483648
    %v1115 = vxor.u32 %v1111, 2147483648
    %v1116 = vxor.u32 %v1112, 2147483648
    %v1117 = vmul.f32 %v1114, 1.442695
    %v1118 = vpow.pop %v1117
    %v1119 = vmul.f32 %v1115, 1.442695
    %v1120 = vpow.pop %v1119
    %v1121 = vmul.f32 %v1116, 1.442695
    %v1122 = vpow.pop %v1121
    %v1123 = vadd.f32 %v1118, 1.0
    %v1124 = vadd.f32 %v1120, 1.0
    %v1125 = vadd.f32 %v1122, 1.0
    %v1126 = vrcp.pop %v1123
    %v1127 = vmul.f32 1.0, %v1126
    %v1128 = vrcp.pop %v1124
    %v1129 = vmul.f32 1.0, %v1128
    %v1130 = vrcp.pop %v1125
    %v1131 = vmul.f32 1.0, %v1130
    %v1132 = vtanh.pop %v1113
    %v1133 = vmul.f32 %v1129, %v997
    %v1134 = vmul.f32 %v1127, %v1132
    %v1135 = vadd.f32 %v1133, %v1134
    %v1136 = vtanh.pop %v1135
    %v1137 = vmul.f32 %v1131, %v1136
    %v1138 = vpack.c.bf16 %v1137, %v1137
    %s1139 = scalar_lea.vmem %s0, 12
    %v1140 = vld [vmem:[%s1139] sm:$0x3]
    %1142 = vset.pattern.permute.xlu0 0
    %1143 = vperm.xlu0 %1142, %v1140
    %v1144 = vpop.permute.xlu0 %1143
    %v1146 = vmul.f32 %v1144, %v65
    %v1147 = vmul.f32 %v1144, %v69
    %v1148 = vmul.f32 %v1144, %v73
    %v1149 = vmul.f32 %v1144, %v77
    %v1150 = vadd.f32 %v90, %v1146
    %v1151 = vadd.f32 %v94, %v1147
    %v1152 = vadd.f32 %v98, %v1148
    %v1153 = vadd.f32 %v102, %v1149
    %1154 = vset.pattern.permute.xlu0 1
    %1155 = vperm.xlu0 %1154, %v1140
    %v1156 = vpop.permute.xlu0 %1155
    %v1158 = vmul.f32 %v1156, %v121
    %v1159 = vmul.f32 %v1156, %v125
    %v1160 = vmul.f32 %v1156, %v129
    %v1161 = vmul.f32 %v1156, %v133
    %v1162 = vadd.f32 %v1150, %v1158
    %v1163 = vadd.f32 %v1151, %v1159
    %v1164 = vadd.f32 %v1152, %v1160
    %v1165 = vadd.f32 %v1153, %v1161
    %1166 = vmatprep.subr.bf16.mxu0 %v303
    %1167 = vmatpush1.bf16.msra.mxu0 %v302
    %1168 = vmatprep.subr.bf16.mxu0 %v299
    %1169 = vmatpush1.bf16.msra.mxu0 %v298
    %1170 = vmatprep.subr.bf16.mxu0 %v295
    %1171 = vmatpush1.bf16.msra.mxu0 %v294
    %1172 = vmatprep.subr.bf16.mxu0 %v291
    %1173 = vmatpush1.bf16.msra.mxu0 %v290
    %1174 = vmatprep.subr.bf16.mxu0 %v287
    %1175 = vmatpush1.bf16.msra.mxu0 %v286
    %1176 = vmatprep.subr.bf16.mxu0 %v283
    %1177 = vmatpush1.bf16.msra.mxu0 %v282
    %1178 = vmatprep.subr.bf16.mxu0 %v279
    %1179 = vmatpush1.bf16.msra.mxu0 %v278
    %1180 = vmatprep.subr.bf16.mxu0 %v275
    %1181 = vmatpush1.bf16.msra.mxu0 %v274
    %1182 = vmatprep.subr.bf16.mxu0 0
    %1183 = vmatpush2.bf16.msra.mxu0 0
    %1184 = vmatprep.subr.bf16.mxu0 0
    %1185 = vmatpush2.bf16.msra.mxu0 0
    %1186 = vmatprep.subr.bf16.mxu0 0
    %1187 = vmatpush2.bf16.msra.mxu0 0
    %1188 = vmatprep.subr.bf16.mxu0 0
    %1189 = vmatpush2.bf16.msra.mxu0 0
    %1190 = vmatprep.subr.bf16.mxu0 0
    %1191 = vmatpush2.bf16.msra.mxu0 0
    %1192 = vmatprep.subr.bf16.mxu0 0
    %1193 = vmatpush2.bf16.msra.mxu0 0
    %1194 = vmatprep.subr.bf16.mxu0 0
    %1195 = vmatpush2.bf16.msra.mxu0 0
    %1196 = vmatprep.subr.bf16.mxu0 0
    %1197 = vmatpush2.bf16.msra.mxu0 0
    %1198 = vmatprep.mubr.bf16.mxu0 0
    %1199 = vmatmul.mubr.bf16.gmra.mxu0 %v1138
    %v1200 = vpop.f32.mrf.mxu0
    %v1201 = vadd.f32 0.0, %v1200
    %v1202 = vpop.f32.mrf.mxu0
    %v1203 = vadd.f32 0.0, %v1202
    %v1204 = vpop.f32.mrf.mxu0
    %v1205 = vpop.f32.mrf.mxu0
    %1206 = vdwg.mxu0
    %1207 = vmatprep.subr.bf16.mxu0 %v305
    %1208 = vmatpush1.bf16.msra.mxu0 %v304
    %1209 = vmatprep.subr.bf16.mxu0 %v301
    %1210 = vmatpush1.bf16.msra.mxu0 %v300
    %1211 = vmatprep.subr.bf16.mxu0 %v297
    %1212 = vmatpush1.bf16.msra.mxu0 %v296
    %1213 = vmatprep.subr.bf16.mxu0 %v293
    %1214 = vmatpush1.bf16.msra.mxu0 %v292
    %1215 = vmatprep.subr.bf16.mxu0 %v289
    %1216 = vmatpush1.bf16.msra.mxu0 %v288
    %1217 = vmatprep.subr.bf16.mxu0 %v285
    %1218 = vmatpush1.bf16.msra.mxu0 %v284
    %1219 = vmatprep.subr.bf16.mxu0 %v281
    %1220 = vmatpush1.bf16.msra.mxu0 %v280
    %1221 = vmatprep.subr.bf16.mxu0 %v277
    %1222 = vmatpush1.bf16.msra.mxu0 %v276
    %1223 = vmatprep.subr.bf16.mxu0 0
    %1224 = vmatpush2.bf16.msra.mxu0 0
    %1225 = vmatprep.subr.bf16.mxu0 0
    %1226 = vmatpush2.bf16.msra.mxu0 0
    %1227 = vmatprep.subr.bf16.mxu0 0
    %1228 = vmatpush2.bf16.msra.mxu0 0
    %1229 = vmatprep.subr.bf16.mxu0 0
    %1230 = vmatpush2.bf16.msra.mxu0 0
    %1231 = vmatprep.subr.bf16.mxu0 0
    %1232 = vmatpush2.bf16.msra.mxu0 0
    %1233 = vmatprep.subr.bf16.mxu0 0
    %1234 = vmatpush2.bf16.msra.mxu0 0
    %1235 = vmatprep.subr.bf16.mxu0 0
    %1236 = vmatpush2.bf16.msra.mxu0 0
    %1237 = vmatprep.subr.bf16.mxu0 0
    %1238 = vmatpush2.bf16.msra.mxu0 0
    %1239 = vmatprep.mubr.bf16.mxu0 0
    %1240 = vmatmul.mubr.bf16.gmra.mxu0 %v1138
    %v1241 = vpop.f32.mrf.mxu0
    %v1242 = vadd.f32 0.0, %v1241
    %v1243 = vpop.f32.mrf.mxu0
    %v1244 = vadd.f32 0.0, %v1243
    %v1245 = vpop.f32.mrf.mxu0
    %v1246 = vpop.f32.mrf.mxu0
    %1247 = vdwg.mxu0
    %v1248 = vadd.f32 %v1162, %v1201
    %v1249 = vadd.f32 %v1163, %v1203
    %v1250 = vadd.f32 %v1164, %v1242
    %v1251 = vadd.f32 %v1165, %v1244
    %v1252 = vxor.u32 %v1248, 2147483648
    %v1253 = vxor.u32 %v1249, 2147483648
    %v1254 = vxor.u32 %v1250, 2147483648
    %v1255 = vmul.f32 %v1252, 1.442695
    %v1256 = vpow.pop %v1255
    %v1257 = vmul.f32 %v1253, 1.442695
    %v1258 = vpow.pop %v1257
    %v1259 = vmul.f32 %v1254, 1.442695
    %v1260 = vpow.pop %v1259
    %v1261 = vadd.f32 %v1256, 1.0
    %v1262 = vadd.f32 %v1258, 1.0
    %v1263 = vadd.f32 %v1260, 1.0
    %v1264 = vrcp.pop %v1261
    %v1265 = vmul.f32 1.0, %v1264
    %v1266 = vrcp.pop %v1262
    %v1267 = vmul.f32 1.0, %v1266
    %v1268 = vrcp.pop %v1263
    %v1269 = vmul.f32 1.0, %v1268
    %v1270 = vtanh.pop %v1251
    %v1271 = vmul.f32 %v1267, %v1135
    %v1272 = vmul.f32 %v1265, %v1270
    %v1273 = vadd.f32 %v1271, %v1272
    %v1274 = vtanh.pop %v1273
    %v1275 = vmul.f32 %v1269, %v1274
    %v1276 = vpack.c.bf16 %v1275, %v1275
    %s1277 = scalar_lea.vmem %s0, 14
    %v1278 = vld [vmem:[%s1277] sm:$0x3]
    %1280 = vset.pattern.permute.xlu0 0
    %1281 = vperm.xlu0 %1280, %v1278
    %v1282 = vpop.permute.xlu0 %1281
    %v1284 = vmul.f32 %v1282, %v65
    %v1285 = vmul.f32 %v1282, %v69
    %v1286 = vmul.f32 %v1282, %v73
    %v1287 = vmul.f32 %v1282, %v77
    %v1288 = vadd.f32 %v90, %v1284
    %v1289 = vadd.f32 %v94, %v1285
    %v1290 = vadd.f32 %v98, %v1286
    %v1291 = vadd.f32 %v102, %v1287
    %1292 = vset.pattern.permute.xlu0 1
    %1293 = vperm.xlu0 %1292, %v1278
    %v1294 = vpop.permute.xlu0 %1293
    %v1296 = vmul.f32 %v1294, %v121
    %v1297 = vmul.f32 %v1294, %v125
    %v1298 = vmul.f32 %v1294, %v129
    %v1299 = vmul.f32 %v1294, %v133
    %v1300 = vadd.f32 %v1288, %v1296
    %v1301 = vadd.f32 %v1289, %v1297
    %v1302 = vadd.f32 %v1290, %v1298
    %v1303 = vadd.f32 %v1291, %v1299
    %1304 = vmatprep.subr.bf16.mxu0 %v303
    %1305 = vmatpush1.bf16.msra.mxu0 %v302
    %1306 = vmatprep.subr.bf16.mxu0 %v299
    %1307 = vmatpush1.bf16.msra.mxu0 %v298
    %1308 = vmatprep.subr.bf16.mxu0 %v295
    %1309 = vmatpush1.bf16.msra.mxu0 %v294
    %1310 = vmatprep.subr.bf16.mxu0 %v291
    %1311 = vmatpush1.bf16.msra.mxu0 %v290
    %1312 = vmatprep.subr.bf16.mxu0 %v287
    %1313 = vmatpush1.bf16.msra.mxu0 %v286
    %1314 = vmatprep.subr.bf16.mxu0 %v283
    %1315 = vmatpush1.bf16.msra.mxu0 %v282
    %1316 = vmatprep.subr.bf16.mxu0 %v279
    %1317 = vmatpush1.bf16.msra.mxu0 %v278
    %1318 = vmatprep.subr.bf16.mxu0 %v275
    %1319 = vmatpush1.bf16.msra.mxu0 %v274
    %1320 = vmatprep.subr.bf16.mxu0 0
    %1321 = vmatpush2.bf16.msra.mxu0 0
    %1322 = vmatprep.subr.bf16.mxu0 0
    %1323 = vmatpush2.bf16.msra.mxu0 0
    %1324 = vmatprep.subr.bf16.mxu0 0
    %1325 = vmatpush2.bf16.msra.mxu0 0
    %1326 = vmatprep.subr.bf16.mxu0 0
    %1327 = vmatpush2.bf16.msra.mxu0 0
    %1328 = vmatprep.subr.bf16.mxu0 0
    %1329 = vmatpush2.bf16.msra.mxu0 0
    %1330 = vmatprep.subr.bf16.mxu0 0
    %1331 = vmatpush2.bf16.msra.mxu0 0
    %1332 = vmatprep.subr.bf16.mxu0 0
    %1333 = vmatpush2.bf16.msra.mxu0 0
    %1334 = vmatprep.subr.bf16.mxu0 0
    %1335 = vmatpush2.bf16.msra.mxu0 0
    %1336 = vmatprep.mubr.bf16.mxu0 0
    %1337 = vmatmul.mubr.bf16.gmra.mxu0 %v1276
    %v1338 = vpop.f32.mrf.mxu0
    %v1339 = vadd.f32 0.0, %v1338
    %v1340 = vpop.f32.mrf.mxu0
    %v1341 = vadd.f32 0.0, %v1340
    %v1342 = vpop.f32.mrf.mxu0
    %v1343 = vpop.f32.mrf.mxu0
    %1344 = vdwg.mxu0
    %1345 = vmatprep.subr.bf16.mxu0 %v305
    %1346 = vmatpush1.bf16.msra.mxu0 %v304
    %1347 = vmatprep.subr.bf16.mxu0 %v301
    %1348 = vmatpush1.bf16.msra.mxu0 %v300
    %1349 = vmatprep.subr.bf16.mxu0 %v297
    %1350 = vmatpush1.bf16.msra.mxu0 %v296
    %1351 = vmatprep.subr.bf16.mxu0 %v293
    %1352 = vmatpush1.bf16.msra.mxu0 %v292
    %1353 = vmatprep.subr.bf16.mxu0 %v289
    %1354 = vmatpush1.bf16.msra.mxu0 %v288
    %1355 = vmatprep.subr.bf16.mxu0 %v285
    %1356 = vmatpush1.bf16.msra.mxu0 %v284
    %1357 = vmatprep.subr.bf16.mxu0 %v281
    %1358 = vmatpush1.bf16.msra.mxu0 %v280
    %1359 = vmatprep.subr.bf16.mxu0 %v277
    %1360 = vmatpush1.bf16.msra.mxu0 %v276
    %1361 = vmatprep.subr.bf16.mxu0 0
    %1362 = vmatpush2.bf16.msra.mxu0 0
    %1363 = vmatprep.subr.bf16.mxu0 0
    %1364 = vmatpush2.bf16.msra.mxu0 0
    %1365 = vmatprep.subr.bf16.mxu0 0
    %1366 = vmatpush2.bf16.msra.mxu0 0
    %1367 = vmatprep.subr.bf16.mxu0 0
    %1368 = vmatpush2.bf16.msra.mxu0 0
    %1369 = vmatprep.subr.bf16.mxu0 0
    %1370 = vmatpush2.bf16.msra.mxu0 0
    %1371 = vmatprep.subr.bf16.mxu0 0
    %1372 = vmatpush2.bf16.msra.mxu0 0
    %1373 = vmatprep.subr.bf16.mxu0 0
    %1374 = vmatpush2.bf16.msra.mxu0 0
    %1375 = vmatprep.subr.bf16.mxu0 0
    %1376 = vmatpush2.bf16.msra.mxu0 0
    %1377 = vmatprep.mubr.bf16.mxu0 0
    %1378 = vmatmul.mubr.bf16.gmra.mxu0 %v1276
    %v1379 = vpop.f32.mrf.mxu0
    %v1380 = vadd.f32 0.0, %v1379
    %v1381 = vpop.f32.mrf.mxu0
    %v1382 = vadd.f32 0.0, %v1381
    %v1383 = vpop.f32.mrf.mxu0
    %v1384 = vpop.f32.mrf.mxu0
    %1385 = vdwg.mxu0
    %v1386 = vadd.f32 %v1300, %v1339
    %v1387 = vadd.f32 %v1301, %v1341
    %v1388 = vadd.f32 %v1302, %v1380
    %v1389 = vadd.f32 %v1303, %v1382
    %v1390 = vxor.u32 %v1386, 2147483648
    %v1391 = vxor.u32 %v1387, 2147483648
    %v1392 = vxor.u32 %v1388, 2147483648
    %v1393 = vmul.f32 %v1390, 1.442695
    %v1394 = vpow.pop %v1393
    %v1395 = vmul.f32 %v1391, 1.442695
    %v1396 = vpow.pop %v1395
    %v1397 = vmul.f32 %v1392, 1.442695
    %v1398 = vpow.pop %v1397
    %v1399 = vadd.f32 %v1394, 1.0
    %v1400 = vadd.f32 %v1396, 1.0
    %v1401 = vadd.f32 %v1398, 1.0
    %v1402 = vrcp.pop %v1399
    %v1403 = vmul.f32 1.0, %v1402
    %v1404 = vrcp.pop %v1400
    %v1405 = vmul.f32 1.0, %v1404
    %v1406 = vrcp.pop %v1401
    %v1407 = vmul.f32 1.0, %v1406
    %v1408 = vtanh.pop %v1389
    %v1409 = vmul.f32 %v1405, %v1273
    %v1410 = vmul.f32 %v1403, %v1408
    %v1411 = vadd.f32 %v1409, %v1410
    %v1412 = vtanh.pop %v1411
    %v1413 = vmul.f32 %v1407, %v1412
    %v1414 = vpack.c.bf16 %v1413, %v1413
    %v1415 = vunpack.c.l.bf16 %v1414
    %v1416 = vld [vmem:[#allocation5] sm:$0xff]
    %v1417 = vld [vmem:[#allocation5 + $0x8] sm:$0xff]
    %v1418 = vld [vmem:[#allocation5 + $0x10] sm:$0xff]
    %v1419 = vld [vmem:[#allocation5 + $0x18] sm:$0xff]
    %v1420 = vld [vmem:[#allocation5 + $0x20] sm:$0xff]
    %v1421 = vld [vmem:[#allocation5 + $0x28] sm:$0xff]
    %v1422 = vld [vmem:[#allocation5 + $0x30] sm:$0xff]
    %v1423 = vld [vmem:[#allocation5 + $0x38] sm:$0xff]
    %v1424 = vld [vmem:[%s5] sm:$0x1]
    %v1426 = vlaneseq
    %v1427 = vshrl.u32 %v1426, 7
    %v1428 = vsub.s32 0, %v1427
    %v1429 = vrot.slane %v1424, %v1428
    %vm1431 = vcmask 523264
    %v1433 = vsel %vm1431, %v1415, 0
    %1435 = vmatprep.subr.mxu0 0.0
    %1436 = vmatpush1.msra.mxu0 0.0
    %1437 = vmatprep.subr.mxu0 0.0
    %1438 = vmatpush1.msra.mxu0 0.0
    %1439 = vmatprep.subr.mxu0 0.0
    %1440 = vmatpush1.msra.mxu0 0.0
    %1441 = vmatprep.subr.mxu0 0.0
    %1442 = vmatpush1.msra.mxu0 0.0
    %1443 = vmatprep.subr.mxu0 0.0
    %1444 = vmatpush1.msra.mxu0 0.0
    %1445 = vmatprep.subr.mxu0 0.0
    %1446 = vmatpush1.msra.mxu0 0.0
    %1447 = vmatprep.subr.mxu0 0.0
    %1448 = vmatpush1.msra.mxu0 0.0
    %1449 = vmatprep.subr.mxu0 0.0
    %1450 = vmatpush1.msra.mxu0 0.0
    %1451 = vmatprep.subr.mxu0 0.0
    %1452 = vmatpush1.msra.mxu0 %v1423
    %1453 = vmatprep.subr.mxu0 0.0
    %1454 = vmatpush1.msra.mxu0 %v1422
    %1455 = vmatprep.subr.mxu0 0.0
    %1456 = vmatpush1.msra.mxu0 %v1421
    %1457 = vmatprep.subr.mxu0 0.0
    %1458 = vmatpush1.msra.mxu0 %v1420
    %1459 = vmatprep.subr.mxu0 0.0
    %1460 = vmatpush1.msra.mxu0 %v1419
    %1461 = vmatprep.subr.mxu0 0.0
    %1462 = vmatpush1.msra.mxu0 %v1418
    %1463 = vmatprep.subr.mxu0 0.0
    %1464 = vmatpush1.msra.mxu0 %v1417
    %1465 = vmatprep.subr.mxu0 0.0
    %1466 = vmatpush1.msra.mxu0 %v1416
    %1467 = vmatprep.subr.mxu0 0.0
    %1468 = vmatpush2.msra.mxu0 0.0
    %1469 = vmatprep.subr.mxu0 0.0
    %1470 = vmatpush2.msra.mxu0 0.0
    %1471 = vmatprep.subr.mxu0 0.0
    %1472 = vmatpush2.msra.mxu0 0.0
    %1473 = vmatprep.subr.mxu0 0.0
    %1474 = vmatpush2.msra.mxu0 0.0
    %1475 = vmatprep.subr.mxu0 0.0
    %1476 = vmatpush2.msra.mxu0 0.0
    %1477 = vmatprep.subr.mxu0 0.0
    %1478 = vmatpush2.msra.mxu0 0.0
    %1479 = vmatprep.subr.mxu0 0.0
    %1480 = vmatpush2.msra.mxu0 0.0
    %1481 = vmatprep.subr.mxu0 0.0
    %1482 = vmatpush2.msra.mxu0 0.0
    %1483 = vmatprep.subr.mxu0 0.0
    %1484 = vmatpush2.msra.mxu0 0.0
    %1485 = vmatprep.subr.mxu0 0.0
    %1486 = vmatpush2.msra.mxu0 0.0
    %1487 = vmatprep.subr.mxu0 0.0
    %1488 = vmatpush2.msra.mxu0 0.0
    %1489 = vmatprep.subr.mxu0 0.0
    %1490 = vmatpush2.msra.mxu0 0.0
    %1491 = vmatprep.subr.mxu0 0.0
    %1492 = vmatpush2.msra.mxu0 0.0
    %1493 = vmatprep.subr.mxu0 0.0
    %1494 = vmatpush2.msra.mxu0 0.0
    %1495 = vmatprep.subr.mxu0 0.0
    %1496 = vmatpush2.msra.mxu0 0.0
    %1497 = vmatprep.subr.mxu0 0.0
    %1498 = vmatpush2.msra.mxu0 0.0
    %1499 = vmatprep.mubr.f32.mxu0 0.0
    %1500 = vmatmul.mubr.f32.gmra.mxu0 %v1433
    %v1501 = vpop.f32.mrf.mxu0
    %v1502 = vadd.f32 %v1429, %v1501
    %v1503 = vpop.f32.mrf.mxu0
    %1504 = vdwg.mxu0
    %vm1505 = vcmask 1041408
    %v1506 = vsel %vm1505, %v1502, -inf
    %1507 = vmax.xlane.f32.xlu0 %v1506
    %v1508 = vpop.xlane.xlu0 %1507
    %v1509 = vsub.f32 %v1502, %v1508
    %v1510 = vmul.f32 %v1509, 1.442695
    %v1511 = vpow.pop %v1510
    %v1512 = vsel %vm1505, %v1511, 0.0
    %1513 = vadd.xlane.f32.xlu0 %v1512
    %v1514 = vpop.xlane.xlu0 %1513
    %v1515 = vrcp.pop %v1514
    %v1516 = vmul.f32 %v1511, %v1515
    %1517 = vst [vmem:[#allocation7] sm:$0x3] %v1516
    // Predicated region
    $region34: #{lstm_model_2d_forward.1} parent=1 // pred_check
      _
    $region35: #{lstm_model_2d_forward.1} parent=1 // pred_check_branch
      %1519 = sbr.rel (0) target = $region37
    $region36: #{lstm_model_2d_forward.1} parent=1 // pred_region
      %s1521 = ssub.s32 32, 32
      %1522 = vsyncadd [#allocation4], %s1521
      %s1524 = sshll.u32 [#allocation7], 4
      %s1525 = int_to_ptr.vmem [resolvable:$true] %s1524
      %1527 = dma.vmem_to_hbm [thread:$0]  %s1525, 32, %s6, [#allocation4]
    $region37: #{lstm_model_2d_forward.1} parent=1 // pred_fallthru
      _
    // Predicated region
    $region38: #{lstm_model_2d_forward.1} parent=1 // pred_check
      _
    $region39: #{lstm_model_2d_forward.1} parent=1 // pred_check_branch
      %1529 = sbr.rel (0) target = $region41
    $region40: #{lstm_model_2d_forward.1} parent=1 // pred_region
      %1530 = dma.done [#allocation4], 32
    $region41: #{lstm_model_2d_forward.1} parent=1 // pred_fallthru
      _
    %1531 = vsyncpa [#allocation3], 1
    %1532 = vsyncpa [#allocation6], 1
    %1533 = vsyncpa [#allocation4], 1

</llo_original>
